<compile_context>
chip_gen: v7x
topology: tpu7x:2x2x1
jax: 0.10.0
libtpu: 0.0.40
codegen_flags: <defaults>
</compile_context>

<pallas_src>
import functools

import jax
import jax.numpy as jnp
from jax.experimental import pallas as pl
from jax.experimental.pallas import tpu as pltpu


def gat_stack_kernel(*refs, num_layers, num_heads, out_feats):
    """Fused forward over all GAT layers.

    refs = (x, adj, [w, attn_l_flat, attn_r_flat] * num_layers, out, h_scratch)
    """
    H, D = num_heads, out_feats
    x_ref, adj_ref = refs[0], refs[1]
    param_refs = refs[2:2 + 3 * num_layers]
    out_ref = refs[2 + 3 * num_layers]
    h_buf = refs[3 + 3 * num_layers]          # VMEM scratch (N, H*D) between layers

    adj = adj_ref[...]                        # (N, N) f32 0/1, adj[dst, src]
    neg_slope_attn = jnp.float32(0.2)         # GATConv negative_slope
    neg_slope_act = jnp.float32(0.01)         # F.leaky_relu default (inter-layer)
    mask_val = jnp.float32(-1e30)

    h = x_ref[...].astype(jnp.float32)        # (N, F_in) of current layer
    for layer in range(num_layers):
        w = param_refs[3 * layer][...]        # (F_in, H*D)
        al = param_refs[3 * layer + 1][...]   # (1, H*D)
        ar = param_refs[3 * layer + 2][...]   # (1, H*D)
        is_last = (layer == num_layers - 1)
        dst_ref = out_ref if is_last else h_buf

        # fc projection on the MXU.
        feat = jnp.dot(h, w, preferred_element_type=jnp.float32)     # (N, H*D)

        # el[n,h] = sum_d feat[n, h*D+d] * attn_l[h,d]  (VPU multiply + lane reduce,
        # no block-diagonal matmul, no extra inputs).
        f_cols, el_cols, er_cols = [], [], []
        for hd in range(H):
            f_h = feat[:, hd * D:(hd + 1) * D]                        # (N, D)
            f_cols.append(f_h)
            el_cols.append(jnp.sum(f_h * al[:, hd * D:(hd + 1) * D],
                                   axis=1, keepdims=True))            # (N, 1)
            er_cols.append(jnp.sum(f_h * ar[:, hd * D:(hd + 1) * D],
                                   axis=1, keepdims=True))            # (N, 1)
        el_t = jnp.concatenate(el_cols, axis=1).T                      # (H, N) src scores

        # Head-stacked edge scores: e[h, dst, src] = er[dst,h] + el[src,h].
        e = jnp.concatenate(
            [(er_cols[hd] + el_t[hd:hd + 1, :])[None] for hd in range(H)],
            axis=0)                                                    # (H, N, N)

        # One softmax pass for all heads.
        e = jnp.where(e > 0, e, neg_slope_attn * e)                    # leaky_relu(0.2)
        e = jnp.where(adj[None, :, :] > 0, e, mask_val)                # mask non-edges
        p = jnp.exp(e - jnp.max(e, axis=-1, keepdims=True))            # masked -> ~0
        denom = jnp.sum(p, axis=-1, keepdims=True)                     # > 0 (self-loops)
        alpha = p * pl.reciprocal(denom, approx=True)                  # (H, N, N)

        # Per-head aggregation on the MXU; write each head's slice directly
        # into the destination ref (no concatenate).
        for hd in range(H):
            r_h = jnp.dot(alpha[hd], f_cols[hd],
                          preferred_element_type=jnp.float32)          # (N, D)
            if not is_last:
                r_h = jnp.where(r_h > 0, r_h, neg_slope_act * r_h)     # inter-layer act
            dst_ref[:, hd * D:(hd + 1) * D] = r_h

        if not is_last:
            h = h_buf[...]                                             # (N, H*D)


def unsupervised_gat_forward(adj, n_feat, params, *, num_heads, node_hidden_dim):
    """Mirrors UnsupervisedGAT.forward (flatten(1) between layers, heads kept on last)."""
    num_layers = len(params)
    N = n_feat.shape[0]
    H = num_heads
    D = node_hidden_dim // num_heads

    flat_inputs = [n_feat, adj]
    for (w, al, ar) in params:
        # Row-major flatten so lane h*D+d corresponds to (head h, dim d) of feat.
        flat_inputs += [w, al.reshape(1, H * D), ar.reshape(1, H * D)]

    kern = functools.partial(gat_stack_kernel, num_layers=num_layers,
                             num_heads=H, out_feats=D)
    out = pl.pallas_call(
        kern,
        out_shape=jax.ShapeDtypeStruct((N, H * D), jnp.float32),
        in_specs=[pl.BlockSpec(memory_space=pltpu.MemorySpace.VMEM)] * len(flat_inputs),
        out_specs=pl.BlockSpec(memory_space=pltpu.MemorySpace.VMEM),
        scratch_shapes=[pltpu.VMEM((N, H * D), jnp.float32)],
    )(*flat_inputs)
    # PyTorch returns the last layer un-flattened: (N, num_heads, out_feats).
    return out.reshape(N, H, D)


# ---------------- pure-JAX reference (for correctness check) ----------------
def _ref_layer(h, w, al, ar, adj, apply_act):
    N = h.shape[0]
    H, D = al.shape
    feat = (h @ w).reshape(N, H, D)
    el = jnp.sum(feat * al[None], -1)                   # (N, H)
    er = jnp.sum(feat * ar[None], -1)                   # (N, H)
    e = er[:, None, :] + el[None, :, :]                 # (dst, src, H)
    e = jnp.where(e > 0, e, 0.2 * e)
    e = jnp.where(adj[:, :, None] > 0, e, -1e30)
    e = e - e.max(axis=1, keepdims=True)
    p = jnp.exp(e) * adj[:, :, None]
    alpha = p / p.sum(axis=1, keepdims=True)
    rst = jnp.einsum('dsh,shf->dhf', alpha, feat)
    if apply_act:
        rst = jnp.where(rst > 0, rst, 0.01 * rst)
    return rst.reshape(N, H * D)


def _ref_forward(adj, n_feat, params, *, num_heads, node_hidden_dim):
    h = n_feat
    for i, (w, al, ar) in enumerate(params):
        h = _ref_layer(h, w, al, ar, adj, i + 1 < len(params))
    return h.reshape(h.shape[0], num_heads, node_hidden_dim // num_heads)


if __name__ == "__main__":
    # Module config (small): node_input_dim=16, node_hidden_dim=32,
    # edge_input_dim unused by GATConv, num_layers=2, num_heads=4.
    N = 16
    node_input_dim = 16
    node_hidden_dim = 32
    num_layers = 2
    num_heads = 4
    out_feats = node_hidden_dim // num_heads

    key = jax.random.PRNGKey(0)
    k_feat, k_adj, *k_params = jax.random.split(key, 2 + 3 * num_layers)

    # Node features.
    n_feat = jax.random.normal(k_feat, (N, node_input_dim), dtype=jnp.float32)

    # Dense adjacency mask adj[dst, src]; add self-loops so every node has an in-edge.
    adj = (jax.random.uniform(k_adj, (N, N)) < 0.3).astype(jnp.float32)
    adj = jnp.maximum(adj, jnp.eye(N, dtype=jnp.float32))

    # Deterministic parameter init (dgl GATConv: fc bias=False, attn_l/attn_r vectors).
    params = []
    for i in range(num_layers):
        in_dim = node_input_dim if i == 0 else node_hidden_dim
        kw, kl, kr = k_params[3 * i], k_params[3 * i + 1], k_params[3 * i + 2]
        w = 0.1 * jax.random.normal(kw, (in_dim, num_heads * out_feats), dtype=jnp.float32)
        al = 0.1 * jax.random.normal(kl, (num_heads, out_feats), dtype=jnp.float32)
        ar = 0.1 * jax.random.normal(kr, (num_heads, out_feats), dtype=jnp.float32)
        params.append((w, al, ar))

    out = unsupervised_gat_forward(adj, n_feat, params,
                                   num_heads=num_heads,
                                   node_hidden_dim=node_hidden_dim)
    out = jax.block_until_ready(out)

    ref = _ref_forward(adj, n_feat, params,
                       num_heads=num_heads, node_hidden_dim=node_hidden_dim)
    assert out.shape == (N, num_heads, out_feats), out.shape
    # Tolerance slightly relaxed vs exact division because of the EUP approx reciprocal.
    assert jnp.allclose(out, ref, rtol=2e-3, atol=2e-3), "mismatch vs reference"

    print("KERNEL_OK")
</pallas_src>

<mosaic_0001>
module attributes {stable_mosaic.version = 11 : i64} {
  func.func @gat_stack_kernel(%arg0: memref<16x16xf32, #tpu.memory_space<vmem>>, %arg1: memref<16x16xf32, #tpu.memory_space<vmem>>, %arg2: memref<16x32xf32, #tpu.memory_space<vmem>>, %arg3: memref<1x32xf32, #tpu.memory_space<vmem>>, %arg4: memref<1x32xf32, #tpu.memory_space<vmem>>, %arg5: memref<32x32xf32, #tpu.memory_space<vmem>>, %arg6: memref<1x32xf32, #tpu.memory_space<vmem>>, %arg7: memref<1x32xf32, #tpu.memory_space<vmem>>, %arg8: memref<16x32xf32, #tpu.memory_space<vmem>>, %arg9: memref<16x32xf32, #tpu.memory_space<vmem>>) attributes {dimension_semantics = [], scalar_prefetch = 0 : i64, scratch_operands = 1 : i64, tpu.core_type = #tpu.core_type<tc>} {
    %c0 = arith.constant 0 : index
    %c0_0 = arith.constant 0 : index
    %0 = vector.load %arg1[%c0, %c0_0] : memref<16x16xf32, #tpu.memory_space<vmem>>, vector<16x16xf32>
    %c0_1 = arith.constant 0 : index
    %c0_2 = arith.constant 0 : index
    %1 = vector.load %arg0[%c0_1, %c0_2] : memref<16x16xf32, #tpu.memory_space<vmem>>, vector<16x16xf32>
    %c0_3 = arith.constant 0 : index
    %c0_4 = arith.constant 0 : index
    %2 = vector.load %arg2[%c0_3, %c0_4] : memref<16x32xf32, #tpu.memory_space<vmem>>, vector<16x32xf32>
    %c0_5 = arith.constant 0 : index
    %c0_6 = arith.constant 0 : index
    %3 = vector.load %arg3[%c0_5, %c0_6] : memref<1x32xf32, #tpu.memory_space<vmem>>, vector<1x32xf32>
    %c0_7 = arith.constant 0 : index
    %c0_8 = arith.constant 0 : index
    %4 = vector.load %arg4[%c0_7, %c0_8] : memref<1x32xf32, #tpu.memory_space<vmem>>, vector<1x32xf32>
    %cst = arith.constant dense<0.000000e+00> : vector<16x32xf32>
    %5 = tpu.matmul %1, %2, %cst {dimension_numbers = #tpu.dot_dimension_numbers<[1], [0], [0], [1], [0, 0, 1, 1], [], []>} : vector<16x16xf32>, vector<16x32xf32>, vector<16x32xf32> -> vector<16x32xf32>
    %6 = vector.extract_strided_slice %5 {offsets = [0, 0], sizes = [16, 8], strides = [1, 1]} : vector<16x32xf32> to vector<16x8xf32>
    %7 = vector.extract_strided_slice %3 {offsets = [0, 0], sizes = [1, 8], strides = [1, 1]} : vector<1x32xf32> to vector<1x8xf32>
    %8 = vector.broadcast %7 : vector<1x8xf32> to vector<16x8xf32>
    %9 = arith.mulf %6, %8 : vector<16x8xf32>
    %cst_9 = arith.constant dense<0.000000e+00> : vector<16xf32>
    %10 = vector.multi_reduction <add>, %9, %cst_9 [1] : vector<16x8xf32> to vector<16xf32>
    %11 = vector.shape_cast %10 : vector<16xf32> to vector<16x1xf32>
    %12 = vector.extract_strided_slice %4 {offsets = [0, 0], sizes = [1, 8], strides = [1, 1]} : vector<1x32xf32> to vector<1x8xf32>
    %13 = vector.broadcast %12 : vector<1x8xf32> to vector<16x8xf32>
    %14 = arith.mulf %6, %13 : vector<16x8xf32>
    %cst_10 = arith.constant dense<0.000000e+00> : vector<16xf32>
    %15 = vector.multi_reduction <add>, %14, %cst_10 [1] : vector<16x8xf32> to vector<16xf32>
    %16 = vector.shape_cast %15 : vector<16xf32> to vector<16x1xf32>
    %17 = vector.extract_strided_slice %5 {offsets = [0, 8], sizes = [16, 8], strides = [1, 1]} : vector<16x32xf32> to vector<16x8xf32>
    %18 = vector.extract_strided_slice %3 {offsets = [0, 8], sizes = [1, 8], strides = [1, 1]} : vector<1x32xf32> to vector<1x8xf32>
    %19 = vector.broadcast %18 : vector<1x8xf32> to vector<16x8xf32>
    %20 = arith.mulf %17, %19 : vector<16x8xf32>
    %cst_11 = arith.constant dense<0.000000e+00> : vector<16xf32>
    %21 = vector.multi_reduction <add>, %20, %cst_11 [1] : vector<16x8xf32> to vector<16xf32>
    %22 = vector.shape_cast %21 : vector<16xf32> to vector<16x1xf32>
    %23 = vector.extract_strided_slice %4 {offsets = [0, 8], sizes = [1, 8], strides = [1, 1]} : vector<1x32xf32> to vector<1x8xf32>
    %24 = vector.broadcast %23 : vector<1x8xf32> to vector<16x8xf32>
    %25 = arith.mulf %17, %24 : vector<16x8xf32>
    %cst_12 = arith.constant dense<0.000000e+00> : vector<16xf32>
    %26 = vector.multi_reduction <add>, %25, %cst_12 [1] : vector<16x8xf32> to vector<16xf32>
    %27 = vector.shape_cast %26 : vector<16xf32> to vector<16x1xf32>
    %28 = vector.extract_strided_slice %5 {offsets = [0, 16], sizes = [16, 8], strides = [1, 1]} : vector<16x32xf32> to vector<16x8xf32>
    %29 = vector.extract_strided_slice %3 {offsets = [0, 16], sizes = [1, 8], strides = [1, 1]} : vector<1x32xf32> to vector<1x8xf32>
    %30 = vector.broadcast %29 : vector<1x8xf32> to vector<16x8xf32>
    %31 = arith.mulf %28, %30 : vector<16x8xf32>
    %cst_13 = arith.constant dense<0.000000e+00> : vector<16xf32>
    %32 = vector.multi_reduction <add>, %31, %cst_13 [1] : vector<16x8xf32> to vector<16xf32>
    %33 = vector.shape_cast %32 : vector<16xf32> to vector<16x1xf32>
    %34 = vector.extract_strided_slice %4 {offsets = [0, 16], sizes = [1, 8], strides = [1, 1]} : vector<1x32xf32> to vector<1x8xf32>
    %35 = vector.broadcast %34 : vector<1x8xf32> to vector<16x8xf32>
    %36 = arith.mulf %28, %35 : vector<16x8xf32>
    %cst_14 = arith.constant dense<0.000000e+00> : vector<16xf32>
    %37 = vector.multi_reduction <add>, %36, %cst_14 [1] : vector<16x8xf32> to vector<16xf32>
    %38 = vector.shape_cast %37 : vector<16xf32> to vector<16x1xf32>
    %39 = vector.extract_strided_slice %5 {offsets = [0, 24], sizes = [16, 8], strides = [1, 1]} : vector<16x32xf32> to vector<16x8xf32>
    %40 = vector.extract_strided_slice %3 {offsets = [0, 24], sizes = [1, 8], strides = [1, 1]} : vector<1x32xf32> to vector<1x8xf32>
    %41 = vector.broadcast %40 : vector<1x8xf32> to vector<16x8xf32>
    %42 = arith.mulf %39, %41 : vector<16x8xf32>
    %cst_15 = arith.constant dense<0.000000e+00> : vector<16xf32>
    %43 = vector.multi_reduction <add>, %42, %cst_15 [1] : vector<16x8xf32> to vector<16xf32>
    %44 = vector.shape_cast %43 : vector<16xf32> to vector<16x1xf32>
    %45 = vector.extract_strided_slice %4 {offsets = [0, 24], sizes = [1, 8], strides = [1, 1]} : vector<1x32xf32> to vector<1x8xf32>
    %46 = vector.broadcast %45 : vector<1x8xf32> to vector<16x8xf32>
    %47 = arith.mulf %39, %46 : vector<16x8xf32>
    %cst_16 = arith.constant dense<0.000000e+00> : vector<16xf32>
    %48 = vector.multi_reduction <add>, %47, %cst_16 [1] : vector<16x8xf32> to vector<16xf32>
    %49 = vector.shape_cast %48 : vector<16xf32> to vector<16x1xf32>
    %50 = tpu.concatenate %11, %22, %33, %44 in 1 : vector<16x1xf32>, vector<16x1xf32>, vector<16x1xf32>, vector<16x1xf32> -> vector<16x4xf32>
    %51 = tpu.transpose %50, [1, 0] : vector<16x4xf32> -> vector<4x16xf32>
    %52 = vector.extract_strided_slice %51 {offsets = [0, 0], sizes = [1, 16], strides = [1, 1]} : vector<4x16xf32> to vector<1x16xf32>
    %53 = vector.broadcast %16 : vector<16x1xf32> to vector<16x16xf32>
    %54 = vector.broadcast %52 : vector<1x16xf32> to vector<16x16xf32>
    %55 = arith.addf %53, %54 : vector<16x16xf32>
    %56 = vector.shape_cast %55 : vector<16x16xf32> to vector<1x16x16xf32>
    %57 = vector.extract_strided_slice %51 {offsets = [1, 0], sizes = [1, 16], strides = [1, 1]} : vector<4x16xf32> to vector<1x16xf32>
    %58 = vector.broadcast %27 : vector<16x1xf32> to vector<16x16xf32>
    %59 = vector.broadcast %57 : vector<1x16xf32> to vector<16x16xf32>
    %60 = arith.addf %58, %59 : vector<16x16xf32>
    %61 = vector.shape_cast %60 : vector<16x16xf32> to vector<1x16x16xf32>
    %62 = vector.extract_strided_slice %51 {offsets = [2, 0], sizes = [1, 16], strides = [1, 1]} : vector<4x16xf32> to vector<1x16xf32>
    %63 = vector.broadcast %38 : vector<16x1xf32> to vector<16x16xf32>
    %64 = vector.broadcast %62 : vector<1x16xf32> to vector<16x16xf32>
    %65 = arith.addf %63, %64 : vector<16x16xf32>
    %66 = vector.shape_cast %65 : vector<16x16xf32> to vector<1x16x16xf32>
    %67 = vector.extract_strided_slice %51 {offsets = [3, 0], sizes = [1, 16], strides = [1, 1]} : vector<4x16xf32> to vector<1x16xf32>
    %68 = vector.broadcast %49 : vector<16x1xf32> to vector<16x16xf32>
    %69 = vector.broadcast %67 : vector<1x16xf32> to vector<16x16xf32>
    %70 = arith.addf %68, %69 : vector<16x16xf32>
    %71 = vector.shape_cast %70 : vector<16x16xf32> to vector<1x16x16xf32>
    %72 = tpu.concatenate %56, %61, %66, %71 in 0 : vector<1x16x16xf32>, vector<1x16x16xf32>, vector<1x16x16xf32>, vector<1x16x16xf32> -> vector<4x16x16xf32>
    %cst_17 = arith.constant 0.000000e+00 : f32
    %73 = vector.broadcast %cst_17 : f32 to vector<4x16x16xf32>
    %74 = arith.cmpf ogt, %72, %73 : vector<4x16x16xf32>
    %cst_18 = arith.constant 2.000000e-01 : f32
    %75 = vector.broadcast %cst_18 : f32 to vector<4x16x16xf32>
    %76 = arith.mulf %75, %72 : vector<4x16x16xf32>
    %77 = arith.select %74, %72, %76 : vector<4x16x16xi1>, vector<4x16x16xf32>
    %78 = vector.shape_cast %0 : vector<16x16xf32> to vector<1x16x16xf32>
    %cst_19 = arith.constant 0.000000e+00 : f32
    %79 = vector.broadcast %cst_19 : f32 to vector<1x16x16xf32>
    %80 = arith.cmpf ogt, %78, %79 : vector<1x16x16xf32>
    %cst_20 = arith.constant -1.000000e+30 : f32
    %81 = vector.shape_cast %80 : vector<1x16x16xi1> to vector<1x16x16xi1>
    %82 = vector.broadcast %81 : vector<1x16x16xi1> to vector<4x16x16xi1>
    %83 = vector.broadcast %cst_20 : f32 to vector<4x16x16xf32>
    %84 = arith.select %82, %77, %83 : vector<4x16x16xi1>, vector<4x16x16xf32>
    %cst_21 = arith.constant dense<0xFF800000> : vector<4x16xf32>
    %85 = vector.multi_reduction <maximumf>, %84, %cst_21 [2] : vector<4x16x16xf32> to vector<4x16xf32>
    %86 = vector.shape_cast %85 : vector<4x16xf32> to vector<4x16x1xf32>
    %87 = vector.broadcast %86 : vector<4x16x1xf32> to vector<4x16x16xf32>
    %88 = arith.subf %84, %87 : vector<4x16x16xf32>
    %89 = math.exp %88 : vector<4x16x16xf32>
    %cst_22 = arith.constant dense<0.000000e+00> : vector<4x16xf32>
    %90 = vector.multi_reduction <add>, %89, %cst_22 [2] : vector<4x16x16xf32> to vector<4x16xf32>
    %91 = vector.shape_cast %90 : vector<4x16xf32> to vector<4x16x1xf32>
    %92 = tpu.reciprocal %91 {approx = true} : vector<4x16x1xf32> -> vector<4x16x1xf32>
    %93 = vector.broadcast %92 : vector<4x16x1xf32> to vector<4x16x16xf32>
    %94 = arith.mulf %89, %93 : vector<4x16x16xf32>
    %95 = vector.extract_strided_slice %94 {offsets = [0, 0, 0], sizes = [1, 16, 16], strides = [1, 1, 1]} : vector<4x16x16xf32> to vector<1x16x16xf32>
    %96 = vector.shape_cast %95 : vector<1x16x16xf32> to vector<16x16xf32>
    %cst_23 = arith.constant dense<0.000000e+00> : vector<16x8xf32>
    %97 = tpu.matmul %96, %6, %cst_23 {dimension_numbers = #tpu.dot_dimension_numbers<[1], [0], [0], [1], [0, 0, 1, 1], [], []>} : vector<16x16xf32>, vector<16x8xf32>, vector<16x8xf32> -> vector<16x8xf32>
    %cst_24 = arith.constant 0.000000e+00 : f32
    %98 = vector.broadcast %cst_24 : f32 to vector<16x8xf32>
    %99 = arith.cmpf ogt, %97, %98 : vector<16x8xf32>
    %cst_25 = arith.constant 0.00999999977 : f32
    %100 = vector.broadcast %cst_25 : f32 to vector<16x8xf32>
    %101 = arith.mulf %100, %97 : vector<16x8xf32>
    %102 = arith.select %99, %97, %101 : vector<16x8xi1>, vector<16x8xf32>
    %c0_26 = arith.constant 0 : index
    %c0_27 = arith.constant 0 : index
    %103 = vector.load %arg9[%c0_26, %c0_27] : memref<16x32xf32, #tpu.memory_space<vmem>>, vector<16x8xf32>
    tpu.vector_store %arg9[%c0_26, %c0_27], %102 {strides = array<i32>} : memref<16x32xf32, #tpu.memory_space<vmem>>, vector<16x8xf32>,
    %104 = vector.extract_strided_slice %94 {offsets = [1, 0, 0], sizes = [1, 16, 16], strides = [1, 1, 1]} : vector<4x16x16xf32> to vector<1x16x16xf32>
    %105 = vector.shape_cast %104 : vector<1x16x16xf32> to vector<16x16xf32>
    %cst_28 = arith.constant dense<0.000000e+00> : vector<16x8xf32>
    %106 = tpu.matmul %105, %17, %cst_28 {dimension_numbers = #tpu.dot_dimension_numbers<[1], [0], [0], [1], [0, 0, 1, 1], [], []>} : vector<16x16xf32>, vector<16x8xf32>, vector<16x8xf32> -> vector<16x8xf32>
    %cst_29 = arith.constant 0.000000e+00 : f32
    %107 = vector.broadcast %cst_29 : f32 to vector<16x8xf32>
    %108 = arith.cmpf ogt, %106, %107 : vector<16x8xf32>
    %cst_30 = arith.constant 0.00999999977 : f32
    %109 = vector.broadcast %cst_30 : f32 to vector<16x8xf32>
    %110 = arith.mulf %109, %106 : vector<16x8xf32>
    %111 = arith.select %108, %106, %110 : vector<16x8xi1>, vector<16x8xf32>
    %c0_31 = arith.constant 0 : index
    %c8 = arith.constant 8 : index
    %112 = vector.load %arg9[%c0_31, %c8] : memref<16x32xf32, #tpu.memory_space<vmem>>, vector<16x8xf32>
    tpu.vector_store %arg9[%c0_31, %c8], %111 {strides = array<i32>} : memref<16x32xf32, #tpu.memory_space<vmem>>, vector<16x8xf32>,
    %113 = vector.extract_strided_slice %94 {offsets = [2, 0, 0], sizes = [1, 16, 16], strides = [1, 1, 1]} : vector<4x16x16xf32> to vector<1x16x16xf32>
    %114 = vector.shape_cast %113 : vector<1x16x16xf32> to vector<16x16xf32>
    %cst_32 = arith.constant dense<0.000000e+00> : vector<16x8xf32>
    %115 = tpu.matmul %114, %28, %cst_32 {dimension_numbers = #tpu.dot_dimension_numbers<[1], [0], [0], [1], [0, 0, 1, 1], [], []>} : vector<16x16xf32>, vector<16x8xf32>, vector<16x8xf32> -> vector<16x8xf32>
    %cst_33 = arith.constant 0.000000e+00 : f32
    %116 = vector.broadcast %cst_33 : f32 to vector<16x8xf32>
    %117 = arith.cmpf ogt, %115, %116 : vector<16x8xf32>
    %cst_34 = arith.constant 0.00999999977 : f32
    %118 = vector.broadcast %cst_34 : f32 to vector<16x8xf32>
    %119 = arith.mulf %118, %115 : vector<16x8xf32>
    %120 = arith.select %117, %115, %119 : vector<16x8xi1>, vector<16x8xf32>
    %c0_35 = arith.constant 0 : index
    %c16 = arith.constant 16 : index
    %121 = vector.load %arg9[%c0_35, %c16] : memref<16x32xf32, #tpu.memory_space<vmem>>, vector<16x8xf32>
    tpu.vector_store %arg9[%c0_35, %c16], %120 {strides = array<i32>} : memref<16x32xf32, #tpu.memory_space<vmem>>, vector<16x8xf32>,
    %122 = vector.extract_strided_slice %94 {offsets = [3, 0, 0], sizes = [1, 16, 16], strides = [1, 1, 1]} : vector<4x16x16xf32> to vector<1x16x16xf32>
    %123 = vector.shape_cast %122 : vector<1x16x16xf32> to vector<16x16xf32>
    %cst_36 = arith.constant dense<0.000000e+00> : vector<16x8xf32>
    %124 = tpu.matmul %123, %39, %cst_36 {dimension_numbers = #tpu.dot_dimension_numbers<[1], [0], [0], [1], [0, 0, 1, 1], [], []>} : vector<16x16xf32>, vector<16x8xf32>, vector<16x8xf32> -> vector<16x8xf32>
    %cst_37 = arith.constant 0.000000e+00 : f32
    %125 = vector.broadcast %cst_37 : f32 to vector<16x8xf32>
    %126 = arith.cmpf ogt, %124, %125 : vector<16x8xf32>
    %cst_38 = arith.constant 0.00999999977 : f32
    %127 = vector.broadcast %cst_38 : f32 to vector<16x8xf32>
    %128 = arith.mulf %127, %124 : vector<16x8xf32>
    %129 = arith.select %126, %124, %128 : vector<16x8xi1>, vector<16x8xf32>
    %c0_39 = arith.constant 0 : index
    %c24 = arith.constant 24 : index
    %130 = vector.load %arg9[%c0_39, %c24] : memref<16x32xf32, #tpu.memory_space<vmem>>, vector<16x8xf32>
    tpu.vector_store %arg9[%c0_39, %c24], %129 {strides = array<i32>} : memref<16x32xf32, #tpu.memory_space<vmem>>, vector<16x8xf32>,
    %c0_40 = arith.constant 0 : index
    %c0_41 = arith.constant 0 : index
    %131 = vector.load %arg9[%c0_40, %c0_41] : memref<16x32xf32, #tpu.memory_space<vmem>>, vector<16x32xf32>
    %c0_42 = arith.constant 0 : index
    %c0_43 = arith.constant 0 : index
    %132 = vector.load %arg5[%c0_42, %c0_43] : memref<32x32xf32, #tpu.memory_space<vmem>>, vector<32x32xf32>
    %c0_44 = arith.constant 0 : index
    %c0_45 = arith.constant 0 : index
    %133 = vector.load %arg6[%c0_44, %c0_45] : memref<1x32xf32, #tpu.memory_space<vmem>>, vector<1x32xf32>
    %c0_46 = arith.constant 0 : index
    %c0_47 = arith.constant 0 : index
    %134 = vector.load %arg7[%c0_46, %c0_47] : memref<1x32xf32, #tpu.memory_space<vmem>>, vector<1x32xf32>
    %cst_48 = arith.constant dense<0.000000e+00> : vector<16x32xf32>
    %135 = tpu.matmul %131, %132, %cst_48 {dimension_numbers = #tpu.dot_dimension_numbers<[1], [0], [0], [1], [0, 0, 1, 1], [], []>} : vector<16x32xf32>, vector<32x32xf32>, vector<16x32xf32> -> vector<16x32xf32>
    %136 = vector.extract_strided_slice %135 {offsets = [0, 0], sizes = [16, 8], strides = [1, 1]} : vector<16x32xf32> to vector<16x8xf32>
    %137 = vector.extract_strided_slice %133 {offsets = [0, 0], sizes = [1, 8], strides = [1, 1]} : vector<1x32xf32> to vector<1x8xf32>
    %138 = vector.broadcast %137 : vector<1x8xf32> to vector<16x8xf32>
    %139 = arith.mulf %136, %138 : vector<16x8xf32>
    %cst_49 = arith.constant dense<0.000000e+00> : vector<16xf32>
    %140 = vector.multi_reduction <add>, %139, %cst_49 [1] : vector<16x8xf32> to vector<16xf32>
    %141 = vector.shape_cast %140 : vector<16xf32> to vector<16x1xf32>
    %142 = vector.extract_strided_slice %134 {offsets = [0, 0], sizes = [1, 8], strides = [1, 1]} : vector<1x32xf32> to vector<1x8xf32>
    %143 = vector.broadcast %142 : vector<1x8xf32> to vector<16x8xf32>
    %144 = arith.mulf %136, %143 : vector<16x8xf32>
    %cst_50 = arith.constant dense<0.000000e+00> : vector<16xf32>
    %145 = vector.multi_reduction <add>, %144, %cst_50 [1] : vector<16x8xf32> to vector<16xf32>
    %146 = vector.shape_cast %145 : vector<16xf32> to vector<16x1xf32>
    %147 = vector.extract_strided_slice %135 {offsets = [0, 8], sizes = [16, 8], strides = [1, 1]} : vector<16x32xf32> to vector<16x8xf32>
    %148 = vector.extract_strided_slice %133 {offsets = [0, 8], sizes = [1, 8], strides = [1, 1]} : vector<1x32xf32> to vector<1x8xf32>
    %149 = vector.broadcast %148 : vector<1x8xf32> to vector<16x8xf32>
    %150 = arith.mulf %147, %149 : vector<16x8xf32>
    %cst_51 = arith.constant dense<0.000000e+00> : vector<16xf32>
    %151 = vector.multi_reduction <add>, %150, %cst_51 [1] : vector<16x8xf32> to vector<16xf32>
    %152 = vector.shape_cast %151 : vector<16xf32> to vector<16x1xf32>
    %153 = vector.extract_strided_slice %134 {offsets = [0, 8], sizes = [1, 8], strides = [1, 1]} : vector<1x32xf32> to vector<1x8xf32>
    %154 = vector.broadcast %153 : vector<1x8xf32> to vector<16x8xf32>
    %155 = arith.mulf %147, %154 : vector<16x8xf32>
    %cst_52 = arith.constant dense<0.000000e+00> : vector<16xf32>
    %156 = vector.multi_reduction <add>, %155, %cst_52 [1] : vector<16x8xf32> to vector<16xf32>
    %157 = vector.shape_cast %156 : vector<16xf32> to vector<16x1xf32>
    %158 = vector.extract_strided_slice %135 {offsets = [0, 16], sizes = [16, 8], strides = [1, 1]} : vector<16x32xf32> to vector<16x8xf32>
    %159 = vector.extract_strided_slice %133 {offsets = [0, 16], sizes = [1, 8], strides = [1, 1]} : vector<1x32xf32> to vector<1x8xf32>
    %160 = vector.broadcast %159 : vector<1x8xf32> to vector<16x8xf32>
    %161 = arith.mulf %158, %160 : vector<16x8xf32>
    %cst_53 = arith.constant dense<0.000000e+00> : vector<16xf32>
    %162 = vector.multi_reduction <add>, %161, %cst_53 [1] : vector<16x8xf32> to vector<16xf32>
    %163 = vector.shape_cast %162 : vector<16xf32> to vector<16x1xf32>
    %164 = vector.extract_strided_slice %134 {offsets = [0, 16], sizes = [1, 8], strides = [1, 1]} : vector<1x32xf32> to vector<1x8xf32>
    %165 = vector.broadcast %164 : vector<1x8xf32> to vector<16x8xf32>
    %166 = arith.mulf %158, %165 : vector<16x8xf32>
    %cst_54 = arith.constant dense<0.000000e+00> : vector<16xf32>
    %167 = vector.multi_reduction <add>, %166, %cst_54 [1] : vector<16x8xf32> to vector<16xf32>
    %168 = vector.shape_cast %167 : vector<16xf32> to vector<16x1xf32>
    %169 = vector.extract_strided_slice %135 {offsets = [0, 24], sizes = [16, 8], strides = [1, 1]} : vector<16x32xf32> to vector<16x8xf32>
    %170 = vector.extract_strided_slice %133 {offsets = [0, 24], sizes = [1, 8], strides = [1, 1]} : vector<1x32xf32> to vector<1x8xf32>
    %171 = vector.broadcast %170 : vector<1x8xf32> to vector<16x8xf32>
    %172 = arith.mulf %169, %171 : vector<16x8xf32>
    %cst_55 = arith.constant dense<0.000000e+00> : vector<16xf32>
    %173 = vector.multi_reduction <add>, %172, %cst_55 [1] : vector<16x8xf32> to vector<16xf32>
    %174 = vector.shape_cast %173 : vector<16xf32> to vector<16x1xf32>
    %175 = vector.extract_strided_slice %134 {offsets = [0, 24], sizes = [1, 8], strides = [1, 1]} : vector<1x32xf32> to vector<1x8xf32>
    %176 = vector.broadcast %175 : vector<1x8xf32> to vector<16x8xf32>
    %177 = arith.mulf %169, %176 : vector<16x8xf32>
    %cst_56 = arith.constant dense<0.000000e+00> : vector<16xf32>
    %178 = vector.multi_reduction <add>, %177, %cst_56 [1] : vector<16x8xf32> to vector<16xf32>
    %179 = vector.shape_cast %178 : vector<16xf32> to vector<16x1xf32>
    %180 = tpu.concatenate %141, %152, %163, %174 in 1 : vector<16x1xf32>, vector<16x1xf32>, vector<16x1xf32>, vector<16x1xf32> -> vector<16x4xf32>
    %181 = tpu.transpose %180, [1, 0] : vector<16x4xf32> -> vector<4x16xf32>
    %182 = vector.extract_strided_slice %181 {offsets = [0, 0], sizes = [1, 16], strides = [1, 1]} : vector<4x16xf32> to vector<1x16xf32>
    %183 = vector.broadcast %146 : vector<16x1xf32> to vector<16x16xf32>
    %184 = vector.broadcast %182 : vector<1x16xf32> to vector<16x16xf32>
    %185 = arith.addf %183, %184 : vector<16x16xf32>
    %186 = vector.shape_cast %185 : vector<16x16xf32> to vector<1x16x16xf32>
    %187 = vector.extract_strided_slice %181 {offsets = [1, 0], sizes = [1, 16], strides = [1, 1]} : vector<4x16xf32> to vector<1x16xf32>
    %188 = vector.broadcast %157 : vector<16x1xf32> to vector<16x16xf32>
    %189 = vector.broadcast %187 : vector<1x16xf32> to vector<16x16xf32>
    %190 = arith.addf %188, %189 : vector<16x16xf32>
    %191 = vector.shape_cast %190 : vector<16x16xf32> to vector<1x16x16xf32>
    %192 = vector.extract_strided_slice %181 {offsets = [2, 0], sizes = [1, 16], strides = [1, 1]} : vector<4x16xf32> to vector<1x16xf32>
    %193 = vector.broadcast %168 : vector<16x1xf32> to vector<16x16xf32>
    %194 = vector.broadcast %192 : vector<1x16xf32> to vector<16x16xf32>
    %195 = arith.addf %193, %194 : vector<16x16xf32>
    %196 = vector.shape_cast %195 : vector<16x16xf32> to vector<1x16x16xf32>
    %197 = vector.extract_strided_slice %181 {offsets = [3, 0], sizes = [1, 16], strides = [1, 1]} : vector<4x16xf32> to vector<1x16xf32>
    %198 = vector.broadcast %179 : vector<16x1xf32> to vector<16x16xf32>
    %199 = vector.broadcast %197 : vector<1x16xf32> to vector<16x16xf32>
    %200 = arith.addf %198, %199 : vector<16x16xf32>
    %201 = vector.shape_cast %200 : vector<16x16xf32> to vector<1x16x16xf32>
    %202 = tpu.concatenate %186, %191, %196, %201 in 0 : vector<1x16x16xf32>, vector<1x16x16xf32>, vector<1x16x16xf32>, vector<1x16x16xf32> -> vector<4x16x16xf32>
    %cst_57 = arith.constant 0.000000e+00 : f32
    %203 = vector.broadcast %cst_57 : f32 to vector<4x16x16xf32>
    %204 = arith.cmpf ogt, %202, %203 : vector<4x16x16xf32>
    %cst_58 = arith.constant 2.000000e-01 : f32
    %205 = vector.broadcast %cst_58 : f32 to vector<4x16x16xf32>
    %206 = arith.mulf %205, %202 : vector<4x16x16xf32>
    %207 = arith.select %204, %202, %206 : vector<4x16x16xi1>, vector<4x16x16xf32>
    %208 = vector.shape_cast %0 : vector<16x16xf32> to vector<1x16x16xf32>
    %cst_59 = arith.constant 0.000000e+00 : f32
    %209 = vector.broadcast %cst_59 : f32 to vector<1x16x16xf32>
    %210 = arith.cmpf ogt, %208, %209 : vector<1x16x16xf32>
    %cst_60 = arith.constant -1.000000e+30 : f32
    %211 = vector.shape_cast %210 : vector<1x16x16xi1> to vector<1x16x16xi1>
    %212 = vector.broadcast %211 : vector<1x16x16xi1> to vector<4x16x16xi1>
    %213 = vector.broadcast %cst_60 : f32 to vector<4x16x16xf32>
    %214 = arith.select %212, %207, %213 : vector<4x16x16xi1>, vector<4x16x16xf32>
    %cst_61 = arith.constant dense<0xFF800000> : vector<4x16xf32>
    %215 = vector.multi_reduction <maximumf>, %214, %cst_61 [2] : vector<4x16x16xf32> to vector<4x16xf32>
    %216 = vector.shape_cast %215 : vector<4x16xf32> to vector<4x16x1xf32>
    %217 = vector.broadcast %216 : vector<4x16x1xf32> to vector<4x16x16xf32>
    %218 = arith.subf %214, %217 : vector<4x16x16xf32>
    %219 = math.exp %218 : vector<4x16x16xf32>
    %cst_62 = arith.constant dense<0.000000e+00> : vector<4x16xf32>
    %220 = vector.multi_reduction <add>, %219, %cst_62 [2] : vector<4x16x16xf32> to vector<4x16xf32>
    %221 = vector.shape_cast %220 : vector<4x16xf32> to vector<4x16x1xf32>
    %222 = tpu.reciprocal %221 {approx = true} : vector<4x16x1xf32> -> vector<4x16x1xf32>
    %223 = vector.broadcast %222 : vector<4x16x1xf32> to vector<4x16x16xf32>
    %224 = arith.mulf %219, %223 : vector<4x16x16xf32>
    %225 = vector.extract_strided_slice %224 {offsets = [0, 0, 0], sizes = [1, 16, 16], strides = [1, 1, 1]} : vector<4x16x16xf32> to vector<1x16x16xf32>
    %226 = vector.shape_cast %225 : vector<1x16x16xf32> to vector<16x16xf32>
    %cst_63 = arith.constant dense<0.000000e+00> : vector<16x8xf32>
    %227 = tpu.matmul %226, %136, %cst_63 {dimension_numbers = #tpu.dot_dimension_numbers<[1], [0], [0], [1], [0, 0, 1, 1], [], []>} : vector<16x16xf32>, vector<16x8xf32>, vector<16x8xf32> -> vector<16x8xf32>
    %c0_64 = arith.constant 0 : index
    %c0_65 = arith.constant 0 : index
    %228 = vector.load %arg8[%c0_64, %c0_65] : memref<16x32xf32, #tpu.memory_space<vmem>>, vector<16x8xf32>
    tpu.vector_store %arg8[%c0_64, %c0_65], %227 {strides = array<i32>} : memref<16x32xf32, #tpu.memory_space<vmem>>, vector<16x8xf32>,
    %229 = vector.extract_strided_slice %224 {offsets = [1, 0, 0], sizes = [1, 16, 16], strides = [1, 1, 1]} : vector<4x16x16xf32> to vector<1x16x16xf32>
    %230 = vector.shape_cast %229 : vector<1x16x16xf32> to vector<16x16xf32>
    %cst_66 = arith.constant dense<0.000000e+00> : vector<16x8xf32>
    %231 = tpu.matmul %230, %147, %cst_66 {dimension_numbers = #tpu.dot_dimension_numbers<[1], [0], [0], [1], [0, 0, 1, 1], [], []>} : vector<16x16xf32>, vector<16x8xf32>, vector<16x8xf32> -> vector<16x8xf32>
    %c0_67 = arith.constant 0 : index
    %c8_68 = arith.constant 8 : index
    %232 = vector.load %arg8[%c0_67, %c8_68] : memref<16x32xf32, #tpu.memory_space<vmem>>, vector<16x8xf32>
    tpu.vector_store %arg8[%c0_67, %c8_68], %231 {strides = array<i32>} : memref<16x32xf32, #tpu.memory_space<vmem>>, vector<16x8xf32>,
    %233 = vector.extract_strided_slice %224 {offsets = [2, 0, 0], sizes = [1, 16, 16], strides = [1, 1, 1]} : vector<4x16x16xf32> to vector<1x16x16xf32>
    %234 = vector.shape_cast %233 : vector<1x16x16xf32> to vector<16x16xf32>
    %cst_69 = arith.constant dense<0.000000e+00> : vector<16x8xf32>
    %235 = tpu.matmul %234, %158, %cst_69 {dimension_numbers = #tpu.dot_dimension_numbers<[1], [0], [0], [1], [0, 0, 1, 1], [], []>} : vector<16x16xf32>, vector<16x8xf32>, vector<16x8xf32> -> vector<16x8xf32>
    %c0_70 = arith.constant 0 : index
    %c16_71 = arith.constant 16 : index
    %236 = vector.load %arg8[%c0_70, %c16_71] : memref<16x32xf32, #tpu.memory_space<vmem>>, vector<16x8xf32>
    tpu.vector_store %arg8[%c0_70, %c16_71], %235 {strides = array<i32>} : memref<16x32xf32, #tpu.memory_space<vmem>>, vector<16x8xf32>,
    %237 = vector.extract_strided_slice %224 {offsets = [3, 0, 0], sizes = [1, 16, 16], strides = [1, 1, 1]} : vector<4x16x16xf32> to vector<1x16x16xf32>
    %238 = vector.shape_cast %237 : vector<1x16x16xf32> to vector<16x16xf32>
    %cst_72 = arith.constant dense<0.000000e+00> : vector<16x8xf32>
    %239 = tpu.matmul %238, %169, %cst_72 {dimension_numbers = #tpu.dot_dimension_numbers<[1], [0], [0], [1], [0, 0, 1, 1], [], []>} : vector<16x16xf32>, vector<16x8xf32>, vector<16x8xf32> -> vector<16x8xf32>
    %c0_73 = arith.constant 0 : index
    %c24_74 = arith.constant 24 : index
    %240 = vector.load %arg8[%c0_73, %c24_74] : memref<16x32xf32, #tpu.memory_space<vmem>>, vector<16x8xf32>
    tpu.vector_store %arg8[%c0_73, %c24_74], %239 {strides = array<i32>} : memref<16x32xf32, #tpu.memory_space<vmem>>, vector<16x8xf32>,
    return
  }
}

</mosaic_0001>

<llo_original>
// kernel: tpu_custom_call.1
$region0: #{tpu_custom_call.1}
  #allocation0 [shape = 'u32[]', space=smem, size = 0x4, offset = 0x4, fixed_abs, tag = 'smem constant byte address 0x4 - core index']
  #allocation1 [shape = 'u32[144,128]{1,0:T(1,128)}', space=vmem, size = 0x12000, scoped, tag = 'internal scratch']
  #allocation2 [shape = 'f32[16,32]{1,0:T(8,128)}', space=vmem, size = 0x2000, scoped, tag = 'scratch operand']
  %s0 = inlined_call_operand.hbm [shape: f32[16,16], index: 0, kind: input, shape index: {}]
  %s1 = inlined_call_operand.hbm [shape: f32[16,16], index: 1, kind: input, shape index: {}]
  %s2 = inlined_call_operand.hbm [shape: f32[16,32], index: 2, kind: input, shape index: {}]
  %s3 = inlined_call_operand.vmem [shape: f32[1,32], index: 3, kind: input, shape index: {}]
  %s4 = inlined_call_operand.vmem [shape: f32[1,32], index: 4, kind: input, shape index: {}]
  %s5 = inlined_call_operand.hbm [shape: f32[32,32], index: 5, kind: input, shape index: {}]
  %s6 = inlined_call_operand.vmem [shape: f32[1,32], index: 6, kind: input, shape index: {}]
  %s7 = inlined_call_operand.vmem [shape: f32[1,32], index: 7, kind: input, shape index: {}]
  %s8 = inlined_call_operand.hbm [shape: f32[16,32], index: 8, kind: output, shape index: {}]
  %s9 = sld [smem:[#allocation0]]
  $region58: #{tpu_custom_call.1} parent=0
    _
  %s11 = ssub.s32 1, %s9
  %s12 = scalar_select 0, %s11, %s9
  $region1: #{tpu_custom_call.1} parent=0
    #allocation3 [shape = 'u8[8192]{0}', space=vmem, size = 0x2000, scoped, tag = 'input window, operand 0, single buffered']
    #allocation4 [shape = 's32[1]{0}', space=sflag, size = 0x4, scoped, tag = 'scoped memory for tpu_custom_call.1']
    #allocation5 [shape = 's32[1]{0}', space=sflag, size = 0x4, scoped, tag = 'scoped memory for tpu_custom_call.1']
    #allocation6 [shape = 'u8[8192]{0}', space=vmem, size = 0x2000, scoped, tag = 'input window, operand 1, single buffered']
    #allocation7 [shape = 's32[1]{0}', space=sflag, size = 0x4, scoped, tag = 'scoped memory for tpu_custom_call.1']
    #allocation8 [shape = 'u8[8192]{0}', space=vmem, size = 0x2000, scoped, tag = 'input window, operand 2, single buffered']
    #allocation9 [shape = 'u8[16384]{0}', space=vmem, size = 0x4000, scoped, tag = 'input window, operand 5, single buffered']
    #allocation10 [shape = 's32[1]{0}', space=sflag, size = 0x4, scoped, tag = 'scoped memory for tpu_custom_call.1']
    #allocation11 [shape = 'u8[8192]{0}', space=vmem, size = 0x2000, scoped, tag = 'output window, operand 0, single buffered']
    %13 = vsyncpa [#allocation4], 0
    %14 = vsyncpa [#allocation7], 0
    %15 = vsyncpa [#allocation10], 0
    %16 = vsyncpa [#allocation5], 0
    // Predicated region
    $region2: #{tpu_custom_call.1} parent=1 // pred_check
      _
    $region3: #{tpu_custom_call.1} parent=1 // pred_check_branch
      %18 = sbr.rel (0) target = $region5
    $region4: #{tpu_custom_call.1} parent=1 // pred_region
      %s20 = ssub.s32 256, 256
      %21 = vsyncadd [#allocation4], %s20
      %s22 = sshll.u32 [#allocation3], 4
      %s23 = int_to_ptr.vmem [resolvable:$true] %s22
      %28 = dma.hbm_to_vmem [thread:$0]  %s0, 256, %s23, [#allocation4], 128, 128, 8
    $region5: #{tpu_custom_call.1} parent=1 // pred_fallthru
      _
    // Predicated region
    $region6: #{tpu_custom_call.1} parent=1 // pred_check
      _
    $region7: #{tpu_custom_call.1} parent=1 // pred_check_branch
      %30 = sbr.rel (0) target = $region9
    $region8: #{tpu_custom_call.1} parent=1 // pred_region
      %s32 = ssub.s32 256, 256
      %33 = vsyncadd [#allocation7], %s32
      %s34 = sshll.u32 [#allocation6], 4
      %s35 = int_to_ptr.vmem [resolvable:$true] %s34
      %40 = dma.hbm_to_vmem [thread:$0]  %s1, 256, %s35, [#allocation7], 128, 128, 8
    $region9: #{tpu_custom_call.1} parent=1 // pred_fallthru
      _
    // Predicated region
    $region10: #{tpu_custom_call.1} parent=1 // pred_check
      _
    $region11: #{tpu_custom_call.1} parent=1 // pred_check_branch
      %42 = sbr.rel (0) target = $region13
    $region12: #{tpu_custom_call.1} parent=1 // pred_region
      %s44 = ssub.s32 256, 256
      %45 = vsyncadd [#allocation7], %s44
      %s46 = sshll.u32 [#allocation8], 4
      %s47 = int_to_ptr.vmem [resolvable:$true] %s46
      %52 = dma.hbm_to_vmem [thread:$0]  %s2, 256, %s47, [#allocation7], 128, 128, 8
    $region13: #{tpu_custom_call.1} parent=1 // pred_fallthru
      _
    // Predicated region
    $region14: #{tpu_custom_call.1} parent=1 // pred_check
      _
    $region15: #{tpu_custom_call.1} parent=1 // pred_check_branch
      %54 = sbr.rel (0) target = $region17
    $region16: #{tpu_custom_call.1} parent=1 // pred_region
      _
    $region17: #{tpu_custom_call.1} parent=1 // pred_fallthru
      _
    // Predicated region
    $region18: #{tpu_custom_call.1} parent=1 // pred_check
      _
    $region19: #{tpu_custom_call.1} parent=1 // pred_check_branch
      %56 = sbr.rel (0) target = $region21
    $region20: #{tpu_custom_call.1} parent=1 // pred_region
      _
    $region21: #{tpu_custom_call.1} parent=1 // pred_fallthru
      _
    // Predicated region
    $region22: #{tpu_custom_call.1} parent=1 // pred_check
      _
    $region23: #{tpu_custom_call.1} parent=1 // pred_check_branch
      %58 = sbr.rel (0) target = $region25
    $region24: #{tpu_custom_call.1} parent=1 // pred_region
      %s60 = ssub.s32 512, 512
      %61 = vsyncadd [#allocation10], %s60
      %s62 = sshll.u32 [#allocation9], 4
      %s63 = int_to_ptr.vmem [resolvable:$true] %s62
      %68 = dma.hbm_to_vmem [thread:$0]  %s5, 512, %s63, [#allocation10], 128, 128, 8
    $region25: #{tpu_custom_call.1} parent=1 // pred_fallthru
      _
    // Predicated region
    $region26: #{tpu_custom_call.1} parent=1 // pred_check
      _
    $region27: #{tpu_custom_call.1} parent=1 // pred_check_branch
      %70 = sbr.rel (0) target = $region29
    $region28: #{tpu_custom_call.1} parent=1 // pred_region
      _
    $region29: #{tpu_custom_call.1} parent=1 // pred_fallthru
      _
    // Predicated region
    $region30: #{tpu_custom_call.1} parent=1 // pred_check
      _
    $region31: #{tpu_custom_call.1} parent=1 // pred_check_branch
      %72 = sbr.rel (0) target = $region33
    $region32: #{tpu_custom_call.1} parent=1 // pred_region
      _
    $region33: #{tpu_custom_call.1} parent=1 // pred_fallthru
      _
    // Predicated region
    $region34: #{tpu_custom_call.1} parent=1 // pred_check
      _
    $region35: #{tpu_custom_call.1} parent=1 // pred_check_branch
      %74 = sbr.rel (0) target = $region37
    $region36: #{tpu_custom_call.1} parent=1 // pred_region
      %75 = dma.done [#allocation4], 256
    $region37: #{tpu_custom_call.1} parent=1 // pred_fallthru
      _
    // Predicated region
    $region38: #{tpu_custom_call.1} parent=1 // pred_check
      _
    $region39: #{tpu_custom_call.1} parent=1 // pred_check_branch
      %77 = sbr.rel (0) target = $region41
    $region40: #{tpu_custom_call.1} parent=1 // pred_region
      %78 = dma.done [#allocation7], 256
    $region41: #{tpu_custom_call.1} parent=1 // pred_fallthru
      _
    // Predicated region
    $region42: #{tpu_custom_call.1} parent=1 // pred_check
      _
    $region43: #{tpu_custom_call.1} parent=1 // pred_check_branch
      %80 = sbr.rel (0) target = $region45
    $region44: #{tpu_custom_call.1} parent=1 // pred_region
      %81 = dma.done [#allocation7], 256
    $region45: #{tpu_custom_call.1} parent=1 // pred_fallthru
      _
    // Predicated region
    $region46: #{tpu_custom_call.1} parent=1 // pred_check
      _
    $region47: #{tpu_custom_call.1} parent=1 // pred_check_branch
      %83 = sbr.rel (0) target = $region49
    $region48: #{tpu_custom_call.1} parent=1 // pred_region
      %84 = dma.done [#allocation10], 512
    $region49: #{tpu_custom_call.1} parent=1 // pred_fallthru
      _
    %v85 = vld [vmem:[#allocation6] sm:$0xff]
    %v86 = vld [vmem:[#allocation6 + $0x8] sm:$0xff]
    %v87 = vld [vmem:[#allocation3] sm:$0xff]
    %v88 = vld [vmem:[#allocation3 + $0x8] sm:$0xff]
    %v89 = vld [vmem:[#allocation8] sm:$0xff]
    %v90 = vld [vmem:[#allocation8 + $0x8] sm:$0xff]
    %v91 = vld [vmem:[%s3] sm:$0x1]
    %v92 = vld [vmem:[%s4] sm:$0x1]
    %vm93 = vcmask 130048
    %v95 = vsel %vm93, %v87, 0
    %v98 = vsel %vm93, %v88, 0
    %100 = vmatprep.subr.mxu0 0.0
    %101 = vmatpush1.msra.mxu0 %v89
    %102 = vmatprep.subr.mxu0 0.0
    %103 = vmatpush1.msra.mxu0 %v90
    %104 = vmatprep.subr.mxu0 0.0
    %105 = vmatpush1.msra.mxu0 0.0
    %106 = vmatprep.subr.mxu0 0.0
    %107 = vmatpush1.msra.mxu0 0.0
    %108 = vmatprep.subr.mxu0 0.0
    %109 = vmatpush1.msra.mxu0 0.0
    %110 = vmatprep.subr.mxu0 0.0
    %111 = vmatpush1.msra.mxu0 0.0
    %112 = vmatprep.subr.mxu0 0.0
    %113 = vmatpush1.msra.mxu0 0.0
    %114 = vmatprep.subr.mxu0 0.0
    %115 = vmatpush1.msra.mxu0 0.0
    %116 = vmatprep.subr.mxu0 0.0
    %117 = vmatpush1.msra.mxu0 0.0
    %118 = vmatprep.subr.mxu0 0.0
    %119 = vmatpush1.msra.mxu0 0.0
    %120 = vmatprep.subr.mxu0 0.0
    %121 = vmatpush1.msra.mxu0 0.0
    %122 = vmatprep.subr.mxu0 0.0
    %123 = vmatpush1.msra.mxu0 0.0
    %124 = vmatprep.subr.mxu0 0.0
    %125 = vmatpush1.msra.mxu0 0.0
    %126 = vmatprep.subr.mxu0 0.0
    %127 = vmatpush1.msra.mxu0 0.0
    %128 = vmatprep.subr.mxu0 0.0
    %129 = vmatpush1.msra.mxu0 0.0
    %130 = vmatprep.subr.mxu0 0.0
    %131 = vmatpush1.msra.mxu0 0.0
    %132 = vmatprep.subr.mxu0 0.0
    %133 = vmatpush1.msra.mxu0 0.0
    %134 = vmatprep.subr.mxu0 0.0
    %135 = vmatpush1.msra.mxu0 0.0
    %136 = vmatprep.subr.mxu0 0.0
    %137 = vmatpush1.msra.mxu0 0.0
    %138 = vmatprep.subr.mxu0 0.0
    %139 = vmatpush1.msra.mxu0 0.0
    %140 = vmatprep.subr.mxu0 0.0
    %141 = vmatpush1.msra.mxu0 0.0
    %142 = vmatprep.subr.mxu0 0.0
    %143 = vmatpush1.msra.mxu0 0.0
    %144 = vmatprep.subr.mxu0 0.0
    %145 = vmatpush1.msra.mxu0 0.0
    %146 = vmatprep.subr.mxu0 0.0
    %147 = vmatpush1.msra.mxu0 0.0
    %148 = vmatprep.subr.mxu0 0.0
    %149 = vmatpush1.msra.mxu0 0.0
    %150 = vmatprep.subr.mxu0 0.0
    %151 = vmatpush1.msra.mxu0 0.0
    %152 = vmatprep.subr.mxu0 0.0
    %153 = vmatpush1.msra.mxu0 0.0
    %154 = vmatprep.subr.mxu0 0.0
    %155 = vmatpush1.msra.mxu0 0.0
    %156 = vmatprep.subr.mxu0 0.0
    %157 = vmatpush1.msra.mxu0 0.0
    %158 = vmatprep.subr.mxu0 0.0
    %159 = vmatpush1.msra.mxu0 0.0
    %160 = vmatprep.subr.mxu0 0.0
    %161 = vmatpush1.msra.mxu0 0.0
    %162 = vmatprep.subr.mxu0 0.0
    %163 = vmatpush1.msra.mxu0 0.0
    %164 = vmatprep.mubr.f32.mxu0 0.0
    %165 = vmatmul.mubr.f32.gmra.mrb[0].mxu0 %v95
    %v166 = vpop.f32.mrb[0].mxu0
    %v167 = vadd.f32 0.0, %v166
    %v168 = vpop.f32.mrb[0].mxu0
    %169 = vmatprep.mubr.f32.mxu0 0.0
    %170 = vmatmul.mubr.f32.gmra.mrb[0].mxu0 %v98
    %v171 = vpop.f32.mrb[0].mxu0
    %v172 = vadd.f32 0.0, %v171
    %v173 = vpop.f32.mrb[0].mxu0
    %174 = vdwg.mxu0
    %v176 = vlaneseq
    %v177 = vshrl.u32 %v176, 7
    %v178 = vsub.s32 0, %v177
    %v179 = vrot.slane %v91, %v178
    %v181 = vmul.f32 %v167, %v179
    %v182 = vmul.f32 %v172, %v179
    %vm183 = vcmask 64512
    %v184 = vsel %vm183, %v181, 0.0
    %185 = vadd.xlane.f32.xlu0 %v184
    %v186 = vpop.xlane.xlu0 %185
    %v187 = vsel %vm183, %v182, 0.0
    %188 = vadd.xlane.f32.xlu0 %v187
    %v189 = vpop.xlane.xlu0 %188
    %v191 = vlaneseq
    %v192 = vshrl.u32 %v191, 7
    %v193 = vsub.s32 0, %v192
    %v194 = vrot.slane %v92, %v193
    %v196 = vmul.f32 %v167, %v194
    %v197 = vmul.f32 %v172, %v194
    %v198 = vsel %vm183, %v196, 0.0
    %199 = vadd.xlane.f32.xlu0 %v198
    %v200 = vpop.xlane.xlu0 %199
    %v201 = vsel %vm183, %v197, 0.0
    %202 = vadd.xlane.f32.xlu0 %v201
    %v203 = vpop.xlane.xlu0 %202
    %206 = vrot.lane.b32.xlu0 %v181, 120
    %v207 = vpop.permute.xlu0 %206
    %208 = vrot.lane.b32.xlu0 %v182, 120
    %v209 = vpop.permute.xlu0 %208
    %v212 = vsel %vm183, %v207, 0.0
    %213 = vadd.xlane.f32.xlu0 %v212
    %v214 = vpop.xlane.xlu0 %213
    %v215 = vsel %vm183, %v209, 0.0
    %216 = vadd.xlane.f32.xlu0 %v215
    %v217 = vpop.xlane.xlu0 %216
    %220 = vrot.lane.b32.xlu0 %v196, 120
    %v221 = vpop.permute.xlu0 %220
    %222 = vrot.lane.b32.xlu0 %v197, 120
    %v223 = vpop.permute.xlu0 %222
    %v226 = vsel %vm183, %v221, 0.0
    %227 = vadd.xlane.f32.xlu0 %v226
    %v228 = vpop.xlane.xlu0 %227
    %v229 = vsel %vm183, %v223, 0.0
    %230 = vadd.xlane.f32.xlu0 %v229
    %v231 = vpop.xlane.xlu0 %230
    %232 = vrot.lane.b32.xlu0 %v181, 112
    %v233 = vpop.permute.xlu0 %232
    %234 = vrot.lane.b32.xlu0 %v182, 112
    %v235 = vpop.permute.xlu0 %234
    %v238 = vsel %vm183, %v233, 0.0
    %239 = vadd.xlane.f32.xlu0 %v238
    %v240 = vpop.xlane.xlu0 %239
    %v241 = vsel %vm183, %v235, 0.0
    %242 = vadd.xlane.f32.xlu0 %v241
    %v243 = vpop.xlane.xlu0 %242
    %244 = vrot.lane.b32.xlu0 %v196, 112
    %v245 = vpop.permute.xlu0 %244
    %246 = vrot.lane.b32.xlu0 %v197, 112
    %v247 = vpop.permute.xlu0 %246
    %v250 = vsel %vm183, %v245, 0.0
    %251 = vadd.xlane.f32.xlu0 %v250
    %v252 = vpop.xlane.xlu0 %251
    %v253 = vsel %vm183, %v247, 0.0
    %254 = vadd.xlane.f32.xlu0 %v253
    %v255 = vpop.xlane.xlu0 %254
    %256 = vrot.lane.b32.xlu0 %v181, 104
    %v257 = vpop.permute.xlu0 %256
    %258 = vrot.lane.b32.xlu0 %v182, 104
    %v259 = vpop.permute.xlu0 %258
    %v262 = vsel %vm183, %v257, 0.0
    %263 = vadd.xlane.f32.xlu0 %v262
    %v264 = vpop.xlane.xlu0 %263
    %v265 = vsel %vm183, %v259, 0.0
    %266 = vadd.xlane.f32.xlu0 %v265
    %v267 = vpop.xlane.xlu0 %266
    %268 = vrot.lane.b32.xlu0 %v196, 104
    %v269 = vpop.permute.xlu0 %268
    %270 = vrot.lane.b32.xlu0 %v197, 104
    %v271 = vpop.permute.xlu0 %270
    %v274 = vsel %vm183, %v269, 0.0
    %275 = vadd.xlane.f32.xlu0 %v274
    %v276 = vpop.xlane.xlu0 %275
    %v277 = vsel %vm183, %v271, 0.0
    %278 = vadd.xlane.f32.xlu0 %v277
    %v279 = vpop.xlane.xlu0 %278
    %vm280 = vcmask 7168
    %v281 = vsel %vm280, %v186, %v214
    %v282 = vsel %vm280, %v189, %v217
    %vm283 = vcmask 15360
    %v284 = vsel %vm283, %v281, %v240
    %v285 = vsel %vm283, %v282, %v243
    %vm286 = vcmask 23552
    %v287 = vsel %vm286, %v284, %v264
    %v288 = vsel %vm286, %v285, %v267
    %289 = vxpose.xlu0.b32.start [1/16] %v287, 128
    %290 = vxpose.xlu0.b32.cont [2/16] %v288, 128
    %291 = vxpose.xlu0.b32.cont [3/16] 0.0, 128
    %292 = vxpose.xlu0.b32.cont [4/16] 0.0, 128
    %293 = vxpose.xlu0.b32.cont [5/16] 0.0, 128
    %294 = vxpose.xlu0.b32.cont [6/16] 0.0, 128
    %295 = vxpose.xlu0.b32.cont [7/16] 0.0, 128
    %296 = vxpose.xlu0.b32.cont [8/16] 0.0, 128
    %297 = vxpose.xlu0.b32.cont [9/16] 0.0, 128
    %298 = vxpose.xlu0.b32.cont [10/16] 0.0, 128
    %299 = vxpose.xlu0.b32.cont [11/16] 0.0, 128
    %300 = vxpose.xlu0.b32.cont [12/16] 0.0, 128
    %301 = vxpose.xlu0.b32.cont [13/16] 0.0, 128
    %302 = vxpose.xlu0.b32.cont [14/16] 0.0, 128
    %303 = vxpose.xlu0.b32.cont [15/16] 0.0, 128
    %304 = vxpose.xlu0.b32.end [16/16] 0.0, 128
    %v305 = vpop.trf.xlu0
    %v306 = vpop.trf.xlu0
    %v307 = vpop.trf.xlu0
    %v308 = vpop.trf.xlu0
    %v309 = vpop.trf.xlu0
    %v310 = vpop.trf.xlu0
    %v311 = vpop.trf.xlu0
    %v312 = vpop.trf.xlu0
    %v313 = vpop.trf.xlu0
    %v314 = vpop.trf.xlu0
    %v315 = vpop.trf.xlu0
    %v316 = vpop.trf.xlu0
    %v317 = vpop.trf.xlu0
    %v318 = vpop.trf.xlu0
    %v319 = vpop.trf.xlu0
    %v320 = vpop.trf.xlu0
    %v321 = vlaneseq
    %v322 = vshrl.u32 %v321, 7
    %v323 = vsub.s32 0, %v322
    %v324 = vrot.slane %v305, %v323
    %v325 = vadd.f32 %v200, %v324
    %v326 = vadd.f32 %v203, %v324
    %v327 = vlaneseq
    %v328 = vshrl.u32 %v327, 7
    %v329 = vsub.s32 1, %v328
    %v330 = vrot.slane %v305, %v329
    %v331 = vadd.f32 %v228, %v330
    %v332 = vadd.f32 %v231, %v330
    %v333 = vlaneseq
    %v334 = vshrl.u32 %v333, 7
    %v335 = vsub.s32 2, %v334
    %v336 = vrot.slane %v305, %v335
    %v337 = vadd.f32 %v252, %v336
    %v338 = vadd.f32 %v255, %v336
    %v339 = vlaneseq
    %v340 = vshrl.u32 %v339, 7
    %v341 = vsub.s32 3, %v340
    %v342 = vrot.slane %v305, %v341
    %v343 = vadd.f32 %v276, %v342
    %v344 = vadd.f32 %v279, %v342
    %vm345 = vcmp.gt.f32.partialorder %v325, 0.0
    %vm346 = vcmp.gt.f32.partialorder %v326, 0.0
    %vm347 = vcmp.gt.f32.partialorder %v331, 0.0
    %vm348 = vcmp.gt.f32.partialorder %v332, 0.0
    %vm349 = vcmp.gt.f32.partialorder %v337, 0.0
    %vm350 = vcmp.gt.f32.partialorder %v338, 0.0
    %vm351 = vcmp.gt.f32.partialorder %v343, 0.0
    %vm352 = vcmp.gt.f32.partialorder %v344, 0.0
    %v353 = vmul.f32 %v325, 0.2
    %v354 = vmul.f32 %v326, 0.2
    %v355 = vmul.f32 %v331, 0.2
    %v356 = vmul.f32 %v332, 0.2
    %v357 = vmul.f32 %v337, 0.2
    %v358 = vmul.f32 %v338, 0.2
    %v359 = vmul.f32 %v343, 0.2
    %v360 = vmul.f32 %v344, 0.2
    %v361 = vsel %vm345, %v325, %v353
    %v362 = vsel %vm346, %v326, %v354
    %v363 = vsel %vm347, %v331, %v355
    %v364 = vsel %vm348, %v332, %v356
    %v365 = vsel %vm349, %v337, %v357
    %v366 = vsel %vm350, %v338, %v358
    %v367 = vsel %vm351, %v343, %v359
    %v368 = vsel %vm352, %v344, %v360
    %vm369 = vcmp.gt.f32.partialorder %v85, 0.0
    %vm370 = vcmp.gt.f32.partialorder %v86, 0.0
    %v371 = vsel %vm369, 1, 0
    %v372 = vsel %vm370, 1, 0
    %vm373 = vcmp.eq.s32.totalorder %v371, 1
    %vm374 = vcmp.eq.s32.totalorder %v372, 1
    %v375 = vsel %vm373, %v361, -1e+30
    %v376 = vsel %vm374, %v362, -1e+30
    %v377 = vsel %vm373, %v363, -1e+30
    %v378 = vsel %vm374, %v364, -1e+30
    %v379 = vsel %vm373, %v365, -1e+30
    %v380 = vsel %vm374, %v366, -1e+30
    %v381 = vsel %vm373, %v367, -1e+30
    %v382 = vsel %vm374, %v368, -1e+30
    %v383 = vsel %vm93, %v375, -inf
    %384 = vmax.xlane.f32.xlu0 %v383
    %v385 = vpop.xlane.xlu0 %384
    %v386 = vsel %vm93, %v376, -inf
    %387 = vmax.xlane.f32.xlu0 %v386
    %v388 = vpop.xlane.xlu0 %387
    %v389 = vsel %vm93, %v377, -inf
    %390 = vmax.xlane.f32.xlu0 %v389
    %v391 = vpop.xlane.xlu0 %390
    %v392 = vsel %vm93, %v378, -inf
    %393 = vmax.xlane.f32.xlu0 %v392
    %v394 = vpop.xlane.xlu0 %393
    %v395 = vsel %vm93, %v379, -inf
    %396 = vmax.xlane.f32.xlu0 %v395
    %v397 = vpop.xlane.xlu0 %396
    %v398 = vsel %vm93, %v380, -inf
    %399 = vmax.xlane.f32.xlu0 %v398
    %v400 = vpop.xlane.xlu0 %399
    %v401 = vsel %vm93, %v381, -inf
    %402 = vmax.xlane.f32.xlu0 %v401
    %v403 = vpop.xlane.xlu0 %402
    %v404 = vsel %vm93, %v382, -inf
    %405 = vmax.xlane.f32.xlu0 %v404
    %v406 = vpop.xlane.xlu0 %405
    %v407 = vsub.f32 %v375, %v385
    %v408 = vsub.f32 %v376, %v388
    %v409 = vsub.f32 %v377, %v391
    %v410 = vsub.f32 %v378, %v394
    %v411 = vsub.f32 %v379, %v397
    %v412 = vsub.f32 %v380, %v400
    %v413 = vsub.f32 %v381, %v403
    %v414 = vsub.f32 %v382, %v406
    %v415 = vmul.f32 %v407, 1.442695
    %v416 = vpow.pop %v415
    %v417 = vmul.f32 %v408, 1.442695
    %v418 = vpow.pop %v417
    %v419 = vmul.f32 %v409, 1.442695
    %v420 = vpow.pop %v419
    %v421 = vmul.f32 %v410, 1.442695
    %v422 = vpow.pop %v421
    %v423 = vmul.f32 %v411, 1.442695
    %v424 = vpow.pop %v423
    %v425 = vmul.f32 %v412, 1.442695
    %v426 = vpow.pop %v425
    %v427 = vmul.f32 %v413, 1.442695
    %v428 = vpow.pop %v427
    %v429 = vmul.f32 %v414, 1.442695
    %v430 = vpow.pop %v429
    %v431 = vsel %vm93, %v416, 0.0
    %432 = vadd.xlane.f32.xlu0 %v431
    %v433 = vpop.xlane.xlu0 %432
    %v434 = vsel %vm93, %v418, 0.0
    %435 = vadd.xlane.f32.xlu0 %v434
    %v436 = vpop.xlane.xlu0 %435
    %v437 = vsel %vm93, %v420, 0.0
    %438 = vadd.xlane.f32.xlu0 %v437
    %v439 = vpop.xlane.xlu0 %438
    %v440 = vsel %vm93, %v422, 0.0
    %441 = vadd.xlane.f32.xlu0 %v440
    %v442 = vpop.xlane.xlu0 %441
    %v443 = vsel %vm93, %v424, 0.0
    %444 = vadd.xlane.f32.xlu0 %v443
    %v445 = vpop.xlane.xlu0 %444
    %v446 = vsel %vm93, %v426, 0.0
    %447 = vadd.xlane.f32.xlu0 %v446
    %v448 = vpop.xlane.xlu0 %447
    %v449 = vsel %vm93, %v428, 0.0
    %450 = vadd.xlane.f32.xlu0 %v449
    %v451 = vpop.xlane.xlu0 %450
    %v452 = vsel %vm93, %v430, 0.0
    %453 = vadd.xlane.f32.xlu0 %v452
    %v454 = vpop.xlane.xlu0 %453
    %v455 = vrcp.pop %v433
    %v456 = vrcp.pop %v436
    %v457 = vrcp.pop %v439
    %v458 = vrcp.pop %v442
    %v459 = vrcp.pop %v445
    %v460 = vrcp.pop %v448
    %v461 = vrcp.pop %v451
    %v462 = vrcp.pop %v454
    %v463 = vmul.f32 %v416, %v455
    %v464 = vmul.f32 %v418, %v456
    %v465 = vmul.f32 %v420, %v457
    %v466 = vmul.f32 %v422, %v458
    %v467 = vmul.f32 %v424, %v459
    %v468 = vmul.f32 %v426, %v460
    %v469 = vmul.f32 %v428, %v461
    %v470 = vmul.f32 %v430, %v462
    %v472 = vsel %vm93, %v463, 0
    %v475 = vsel %vm93, %v464, 0
    %477 = vmatprep.subr.mxu0 0.0
    %478 = vmatpush1.msra.mxu0 %v167
    %479 = vmatprep.subr.mxu0 0.0
    %480 = vmatpush1.msra.mxu0 %v172
    %481 = vmatprep.subr.mxu0 0.0
    %482 = vmatpush1.msra.mxu0 0.0
    %483 = vmatprep.subr.mxu0 0.0
    %484 = vmatpush1.msra.mxu0 0.0
    %485 = vmatprep.subr.mxu0 0.0
    %486 = vmatpush1.msra.mxu0 0.0
    %487 = vmatprep.subr.mxu0 0.0
    %488 = vmatpush1.msra.mxu0 0.0
    %489 = vmatprep.subr.mxu0 0.0
    %490 = vmatpush1.msra.mxu0 0.0
    %491 = vmatprep.subr.mxu0 0.0
    %492 = vmatpush1.msra.mxu0 0.0
    %493 = vmatprep.subr.mxu0 0.0
    %494 = vmatpush1.msra.mxu0 0.0
    %495 = vmatprep.subr.mxu0 0.0
    %496 = vmatpush1.msra.mxu0 0.0
    %497 = vmatprep.subr.mxu0 0.0
    %498 = vmatpush1.msra.mxu0 0.0
    %499 = vmatprep.subr.mxu0 0.0
    %500 = vmatpush1.msra.mxu0 0.0
    %501 = vmatprep.subr.mxu0 0.0
    %502 = vmatpush1.msra.mxu0 0.0
    %503 = vmatprep.subr.mxu0 0.0
    %504 = vmatpush1.msra.mxu0 0.0
    %505 = vmatprep.subr.mxu0 0.0
    %506 = vmatpush1.msra.mxu0 0.0
    %507 = vmatprep.subr.mxu0 0.0
    %508 = vmatpush1.msra.mxu0 0.0
    %509 = vmatprep.subr.mxu0 0.0
    %510 = vmatpush1.msra.mxu0 0.0
    %511 = vmatprep.subr.mxu0 0.0
    %512 = vmatpush1.msra.mxu0 0.0
    %513 = vmatprep.subr.mxu0 0.0
    %514 = vmatpush1.msra.mxu0 0.0
    %515 = vmatprep.subr.mxu0 0.0
    %516 = vmatpush1.msra.mxu0 0.0
    %517 = vmatprep.subr.mxu0 0.0
    %518 = vmatpush1.msra.mxu0 0.0
    %519 = vmatprep.subr.mxu0 0.0
    %520 = vmatpush1.msra.mxu0 0.0
    %521 = vmatprep.subr.mxu0 0.0
    %522 = vmatpush1.msra.mxu0 0.0
    %523 = vmatprep.subr.mxu0 0.0
    %524 = vmatpush1.msra.mxu0 0.0
    %525 = vmatprep.subr.mxu0 0.0
    %526 = vmatpush1.msra.mxu0 0.0
    %527 = vmatprep.subr.mxu0 0.0
    %528 = vmatpush1.msra.mxu0 0.0
    %529 = vmatprep.subr.mxu0 0.0
    %530 = vmatpush1.msra.mxu0 0.0
    %531 = vmatprep.subr.mxu0 0.0
    %532 = vmatpush1.msra.mxu0 0.0
    %533 = vmatprep.subr.mxu0 0.0
    %534 = vmatpush1.msra.mxu0 0.0
    %535 = vmatprep.subr.mxu0 0.0
    %536 = vmatpush1.msra.mxu0 0.0
    %537 = vmatprep.subr.mxu0 0.0
    %538 = vmatpush1.msra.mxu0 0.0
    %539 = vmatprep.subr.mxu0 0.0
    %540 = vmatpush1.msra.mxu0 0.0
    %541 = vmatprep.mubr.f32.mxu0 0.0
    %542 = vmatmul.mubr.f32.gmra.mrb[0].mxu0 %v472
    %v543 = vpop.f32.mrb[0].mxu0
    %v544 = vadd.f32 0.0, %v543
    %v545 = vpop.f32.mrb[0].mxu0
    %546 = vmatprep.mubr.f32.mxu0 0.0
    %547 = vmatmul.mubr.f32.gmra.mrb[0].mxu0 %v475
    %v548 = vpop.f32.mrb[0].mxu0
    %v549 = vadd.f32 0.0, %v548
    %v550 = vpop.f32.mrb[0].mxu0
    %551 = vdwg.mxu0
    %vm552 = vcmp.gt.f32.partialorder %v544, 0.0
    %vm553 = vcmp.gt.f32.partialorder %v549, 0.0
    %v554 = vmul.f32 %v544, 0.01
    %v555 = vmul.f32 %v549, 0.01
    %v556 = vsel %vm552, %v544, %v554
    %v557 = vsel %vm553, %v549, %v555
    %558 = vst.msk [vmem:[#allocation2] sm:$0xff] %vm183, %v556
    %559 = vst.msk [vmem:[#allocation2 + $0x8] sm:$0xff] %vm183, %v557
    %562 = vrot.lane.b32.xlu0 %v167, 120
    %v563 = vpop.permute.xlu0 %562
    %564 = vrot.lane.b32.xlu0 %v172, 120
    %v565 = vpop.permute.xlu0 %564
    %v569 = vsel %vm93, %v465, 0
    %v572 = vsel %vm93, %v466, 0
    %574 = vmatprep.subr.mxu0 0.0
    %575 = vmatpush1.msra.mxu0 %v563
    %576 = vmatprep.subr.mxu0 0.0
    %577 = vmatpush1.msra.mxu0 %v565
    %578 = vmatprep.subr.mxu0 0.0
    %579 = vmatpush1.msra.mxu0 0.0
    %580 = vmatprep.subr.mxu0 0.0
    %581 = vmatpush1.msra.mxu0 0.0
    %582 = vmatprep.subr.mxu0 0.0
    %583 = vmatpush1.msra.mxu0 0.0
    %584 = vmatprep.subr.mxu0 0.0
    %585 = vmatpush1.msra.mxu0 0.0
    %586 = vmatprep.subr.mxu0 0.0
    %587 = vmatpush1.msra.mxu0 0.0
    %588 = vmatprep.subr.mxu0 0.0
    %589 = vmatpush1.msra.mxu0 0.0
    %590 = vmatprep.subr.mxu0 0.0
    %591 = vmatpush1.msra.mxu0 0.0
    %592 = vmatprep.subr.mxu0 0.0
    %593 = vmatpush1.msra.mxu0 0.0
    %594 = vmatprep.subr.mxu0 0.0
    %595 = vmatpush1.msra.mxu0 0.0
    %596 = vmatprep.subr.mxu0 0.0
    %597 = vmatpush1.msra.mxu0 0.0
    %598 = vmatprep.subr.mxu0 0.0
    %599 = vmatpush1.msra.mxu0 0.0
    %600 = vmatprep.subr.mxu0 0.0
    %601 = vmatpush1.msra.mxu0 0.0
    %602 = vmatprep.subr.mxu0 0.0
    %603 = vmatpush1.msra.mxu0 0.0
    %604 = vmatprep.subr.mxu0 0.0
    %605 = vmatpush1.msra.mxu0 0.0
    %606 = vmatprep.subr.mxu0 0.0
    %607 = vmatpush1.msra.mxu0 0.0
    %608 = vmatprep.subr.mxu0 0.0
    %609 = vmatpush1.msra.mxu0 0.0
    %610 = vmatprep.subr.mxu0 0.0
    %611 = vmatpush1.msra.mxu0 0.0
    %612 = vmatprep.subr.mxu0 0.0
    %613 = vmatpush1.msra.mxu0 0.0
    %614 = vmatprep.subr.mxu0 0.0
    %615 = vmatpush1.msra.mxu0 0.0
    %616 = vmatprep.subr.mxu0 0.0
    %617 = vmatpush1.msra.mxu0 0.0
    %618 = vmatprep.subr.mxu0 0.0
    %619 = vmatpush1.msra.mxu0 0.0
    %620 = vmatprep.subr.mxu0 0.0
    %621 = vmatpush1.msra.mxu0 0.0
    %622 = vmatprep.subr.mxu0 0.0
    %623 = vmatpush1.msra.mxu0 0.0
    %624 = vmatprep.subr.mxu0 0.0
    %625 = vmatpush1.msra.mxu0 0.0
    %626 = vmatprep.subr.mxu0 0.0
    %627 = vmatpush1.msra.mxu0 0.0
    %628 = vmatprep.subr.mxu0 0.0
    %629 = vmatpush1.msra.mxu0 0.0
    %630 = vmatprep.subr.mxu0 0.0
    %631 = vmatpush1.msra.mxu0 0.0
    %632 = vmatprep.subr.mxu0 0.0
    %633 = vmatpush1.msra.mxu0 0.0
    %634 = vmatprep.subr.mxu0 0.0
    %635 = vmatpush1.msra.mxu0 0.0
    %636 = vmatprep.subr.mxu0 0.0
    %637 = vmatpush1.msra.mxu0 0.0
    %638 = vmatprep.mubr.f32.mxu0 0.0
    %639 = vmatmul.mubr.f32.gmra.mrb[0].mxu0 %v569
    %v640 = vpop.f32.mrb[0].mxu0
    %v641 = vadd.f32 0.0, %v640
    %v642 = vpop.f32.mrb[0].mxu0
    %643 = vmatprep.mubr.f32.mxu0 0.0
    %644 = vmatmul.mubr.f32.gmra.mrb[0].mxu0 %v572
    %v645 = vpop.f32.mrb[0].mxu0
    %v646 = vadd.f32 0.0, %v645
    %v647 = vpop.f32.mrb[0].mxu0
    %648 = vdwg.mxu0
    %vm649 = vcmp.gt.f32.partialorder %v641, 0.0
    %vm650 = vcmp.gt.f32.partialorder %v646, 0.0
    %v651 = vmul.f32 %v641, 0.01
    %v652 = vmul.f32 %v646, 0.01
    %v653 = vsel %vm649, %v641, %v651
    %v654 = vsel %vm650, %v646, %v652
    %657 = vrot.lane.b32.xlu0 %v653, 8
    %v658 = vpop.permute.xlu0 %657
    %659 = vrot.lane.b32.xlu0 %v654, 8
    %v660 = vpop.permute.xlu0 %659
    %vm663 = vcmask 130112
    %664 = vst.msk [vmem:[#allocation2] sm:$0xff] %vm663, %v658
    %665 = vst.msk [vmem:[#allocation2 + $0x8] sm:$0xff] %vm663, %v660
    %666 = vrot.lane.b32.xlu0 %v167, 112
    %v667 = vpop.permute.xlu0 %666
    %668 = vrot.lane.b32.xlu0 %v172, 112
    %v669 = vpop.permute.xlu0 %668
    %v673 = vsel %vm93, %v467, 0
    %v676 = vsel %vm93, %v468, 0
    %678 = vmatprep.subr.mxu0 0.0
    %679 = vmatpush1.msra.mxu0 %v667
    %680 = vmatprep.subr.mxu0 0.0
    %681 = vmatpush1.msra.mxu0 %v669
    %682 = vmatprep.subr.mxu0 0.0
    %683 = vmatpush1.msra.mxu0 0.0
    %684 = vmatprep.subr.mxu0 0.0
    %685 = vmatpush1.msra.mxu0 0.0
    %686 = vmatprep.subr.mxu0 0.0
    %687 = vmatpush1.msra.mxu0 0.0
    %688 = vmatprep.subr.mxu0 0.0
    %689 = vmatpush1.msra.mxu0 0.0
    %690 = vmatprep.subr.mxu0 0.0
    %691 = vmatpush1.msra.mxu0 0.0
    %692 = vmatprep.subr.mxu0 0.0
    %693 = vmatpush1.msra.mxu0 0.0
    %694 = vmatprep.subr.mxu0 0.0
    %695 = vmatpush1.msra.mxu0 0.0
    %696 = vmatprep.subr.mxu0 0.0
    %697 = vmatpush1.msra.mxu0 0.0
    %698 = vmatprep.subr.mxu0 0.0
    %699 = vmatpush1.msra.mxu0 0.0
    %700 = vmatprep.subr.mxu0 0.0
    %701 = vmatpush1.msra.mxu0 0.0
    %702 = vmatprep.subr.mxu0 0.0
    %703 = vmatpush1.msra.mxu0 0.0
    %704 = vmatprep.subr.mxu0 0.0
    %705 = vmatpush1.msra.mxu0 0.0
    %706 = vmatprep.subr.mxu0 0.0
    %707 = vmatpush1.msra.mxu0 0.0
    %708 = vmatprep.subr.mxu0 0.0
    %709 = vmatpush1.msra.mxu0 0.0
    %710 = vmatprep.subr.mxu0 0.0
    %711 = vmatpush1.msra.mxu0 0.0
    %712 = vmatprep.subr.mxu0 0.0
    %713 = vmatpush1.msra.mxu0 0.0
    %714 = vmatprep.subr.mxu0 0.0
    %715 = vmatpush1.msra.mxu0 0.0
    %716 = vmatprep.subr.mxu0 0.0
    %717 = vmatpush1.msra.mxu0 0.0
    %718 = vmatprep.subr.mxu0 0.0
    %719 = vmatpush1.msra.mxu0 0.0
    %720 = vmatprep.subr.mxu0 0.0
    %721 = vmatpush1.msra.mxu0 0.0
    %722 = vmatprep.subr.mxu0 0.0
    %723 = vmatpush1.msra.mxu0 0.0
    %724 = vmatprep.subr.mxu0 0.0
    %725 = vmatpush1.msra.mxu0 0.0
    %726 = vmatprep.subr.mxu0 0.0
    %727 = vmatpush1.msra.mxu0 0.0
    %728 = vmatprep.subr.mxu0 0.0
    %729 = vmatpush1.msra.mxu0 0.0
    %730 = vmatprep.subr.mxu0 0.0
    %731 = vmatpush1.msra.mxu0 0.0
    %732 = vmatprep.subr.mxu0 0.0
    %733 = vmatpush1.msra.mxu0 0.0
    %734 = vmatprep.subr.mxu0 0.0
    %735 = vmatpush1.msra.mxu0 0.0
    %736 = vmatprep.subr.mxu0 0.0
    %737 = vmatpush1.msra.mxu0 0.0
    %738 = vmatprep.subr.mxu0 0.0
    %739 = vmatpush1.msra.mxu0 0.0
    %740 = vmatprep.subr.mxu0 0.0
    %741 = vmatpush1.msra.mxu0 0.0
    %742 = vmatprep.mubr.f32.mxu0 0.0
    %743 = vmatmul.mubr.f32.gmra.mrb[0].mxu0 %v673
    %v744 = vpop.f32.mrb[0].mxu0
    %v745 = vadd.f32 0.0, %v744
    %v746 = vpop.f32.mrb[0].mxu0
    %747 = vmatprep.mubr.f32.mxu0 0.0
    %748 = vmatmul.mubr.f32.gmra.mrb[0].mxu0 %v676
    %v749 = vpop.f32.mrb[0].mxu0
    %v750 = vadd.f32 0.0, %v749
    %v751 = vpop.f32.mrb[0].mxu0
    %752 = vdwg.mxu0
    %vm753 = vcmp.gt.f32.partialorder %v745, 0.0
    %vm754 = vcmp.gt.f32.partialorder %v750, 0.0
    %v755 = vmul.f32 %v745, 0.01
    %v756 = vmul.f32 %v750, 0.01
    %v757 = vsel %vm753, %v745, %v755
    %v758 = vsel %vm754, %v750, %v756
    %761 = vrot.lane.b32.xlu0 %v757, 16
    %v762 = vpop.permute.xlu0 %761
    %763 = vrot.lane.b32.xlu0 %v758, 16
    %v764 = vpop.permute.xlu0 %763
    %vm767 = vcmask 195712
    %768 = vst.msk [vmem:[#allocation2] sm:$0xff] %vm767, %v762
    %769 = vst.msk [vmem:[#allocation2 + $0x8] sm:$0xff] %vm767, %v764
    %770 = vrot.lane.b32.xlu0 %v167, 104
    %v771 = vpop.permute.xlu0 %770
    %772 = vrot.lane.b32.xlu0 %v172, 104
    %v773 = vpop.permute.xlu0 %772
    %v777 = vsel %vm93, %v469, 0
    %v780 = vsel %vm93, %v470, 0
    %782 = vmatprep.subr.mxu0 0.0
    %783 = vmatpush1.msra.mxu0 %v771
    %784 = vmatprep.subr.mxu0 0.0
    %785 = vmatpush1.msra.mxu0 %v773
    %786 = vmatprep.subr.mxu0 0.0
    %787 = vmatpush1.msra.mxu0 0.0
    %788 = vmatprep.subr.mxu0 0.0
    %789 = vmatpush1.msra.mxu0 0.0
    %790 = vmatprep.subr.mxu0 0.0
    %791 = vmatpush1.msra.mxu0 0.0
    %792 = vmatprep.subr.mxu0 0.0
    %793 = vmatpush1.msra.mxu0 0.0
    %794 = vmatprep.subr.mxu0 0.0
    %795 = vmatpush1.msra.mxu0 0.0
    %796 = vmatprep.subr.mxu0 0.0
    %797 = vmatpush1.msra.mxu0 0.0
    %798 = vmatprep.subr.mxu0 0.0
    %799 = vmatpush1.msra.mxu0 0.0
    %800 = vmatprep.subr.mxu0 0.0
    %801 = vmatpush1.msra.mxu0 0.0
    %802 = vmatprep.subr.mxu0 0.0
    %803 = vmatpush1.msra.mxu0 0.0
    %804 = vmatprep.subr.mxu0 0.0
    %805 = vmatpush1.msra.mxu0 0.0
    %806 = vmatprep.subr.mxu0 0.0
    %807 = vmatpush1.msra.mxu0 0.0
    %808 = vmatprep.subr.mxu0 0.0
    %809 = vmatpush1.msra.mxu0 0.0
    %810 = vmatprep.subr.mxu0 0.0
    %811 = vmatpush1.msra.mxu0 0.0
    %812 = vmatprep.subr.mxu0 0.0
    %813 = vmatpush1.msra.mxu0 0.0
    %814 = vmatprep.subr.mxu0 0.0
    %815 = vmatpush1.msra.mxu0 0.0
    %816 = vmatprep.subr.mxu0 0.0
    %817 = vmatpush1.msra.mxu0 0.0
    %818 = vmatprep.subr.mxu0 0.0
    %819 = vmatpush1.msra.mxu0 0.0
    %820 = vmatprep.subr.mxu0 0.0
    %821 = vmatpush1.msra.mxu0 0.0
    %822 = vmatprep.subr.mxu0 0.0
    %823 = vmatpush1.msra.mxu0 0.0
    %824 = vmatprep.subr.mxu0 0.0
    %825 = vmatpush1.msra.mxu0 0.0
    %826 = vmatprep.subr.mxu0 0.0
    %827 = vmatpush1.msra.mxu0 0.0
    %828 = vmatprep.subr.mxu0 0.0
    %829 = vmatpush1.msra.mxu0 0.0
    %830 = vmatprep.subr.mxu0 0.0
    %831 = vmatpush1.msra.mxu0 0.0
    %832 = vmatprep.subr.mxu0 0.0
    %833 = vmatpush1.msra.mxu0 0.0
    %834 = vmatprep.subr.mxu0 0.0
    %835 = vmatpush1.msra.mxu0 0.0
    %836 = vmatprep.subr.mxu0 0.0
    %837 = vmatpush1.msra.mxu0 0.0
    %838 = vmatprep.subr.mxu0 0.0
    %839 = vmatpush1.msra.mxu0 0.0
    %840 = vmatprep.subr.mxu0 0.0
    %841 = vmatpush1.msra.mxu0 0.0
    %842 = vmatprep.subr.mxu0 0.0
    %843 = vmatpush1.msra.mxu0 0.0
    %844 = vmatprep.subr.mxu0 0.0
    %845 = vmatpush1.msra.mxu0 0.0
    %846 = vmatprep.mubr.f32.mxu0 0.0
    %847 = vmatmul.mubr.f32.gmra.mrb[0].mxu0 %v777
    %v848 = vpop.f32.mrb[0].mxu0
    %v849 = vadd.f32 0.0, %v848
    %v850 = vpop.f32.mrb[0].mxu0
    %851 = vmatprep.mubr.f32.mxu0 0.0
    %852 = vmatmul.mubr.f32.gmra.mrb[0].mxu0 %v780
    %v853 = vpop.f32.mrb[0].mxu0
    %v854 = vadd.f32 0.0, %v853
    %v855 = vpop.f32.mrb[0].mxu0
    %856 = vdwg.mxu0
    %vm857 = vcmp.gt.f32.partialorder %v849, 0.0
    %vm858 = vcmp.gt.f32.partialorder %v854, 0.0
    %v859 = vmul.f32 %v849, 0.01
    %v860 = vmul.f32 %v854, 0.01
    %v861 = vsel %vm857, %v849, %v859
    %v862 = vsel %vm858, %v854, %v860
    %865 = vrot.lane.b32.xlu0 %v861, 24
    %v866 = vpop.permute.xlu0 %865
    %867 = vrot.lane.b32.xlu0 %v862, 24
    %v868 = vpop.permute.xlu0 %867
    %vm871 = vcmask 261312
    %872 = vst.msk [vmem:[#allocation2] sm:$0xff] %vm871, %v866
    %873 = vst.msk [vmem:[#allocation2 + $0x8] sm:$0xff] %vm871, %v868
    %v874 = vld [vmem:[#allocation2] sm:$0xff]
    %v875 = vld [vmem:[#allocation2 + $0x8] sm:$0xff]
    %v876 = vld [vmem:[#allocation9] sm:$0xff]
    %v877 = vld [vmem:[#allocation9 + $0x8] sm:$0xff]
    %v878 = vld [vmem:[#allocation9 + $0x10] sm:$0xff]
    %v879 = vld [vmem:[#allocation9 + $0x18] sm:$0xff]
    %v880 = vld [vmem:[%s6] sm:$0x1]
    %v881 = vld [vmem:[%s7] sm:$0x1]
    %vm882 = vcmask 261120
    %v884 = vsel %vm882, %v874, 0
    %v887 = vsel %vm882, %v875, 0
    %889 = vmatprep.subr.mxu0 0.0
    %890 = vmatpush1.msra.mxu0 %v876
    %891 = vmatprep.subr.mxu0 0.0
    %892 = vmatpush1.msra.mxu0 %v877
    %893 = vmatprep.subr.mxu0 0.0
    %894 = vmatpush1.msra.mxu0 %v878
    %895 = vmatprep.subr.mxu0 0.0
    %896 = vmatpush1.msra.mxu0 %v879
    %897 = vmatprep.subr.mxu0 0.0
    %898 = vmatpush1.msra.mxu0 0.0
    %899 = vmatprep.subr.mxu0 0.0
    %900 = vmatpush1.msra.mxu0 0.0
    %901 = vmatprep.subr.mxu0 0.0
    %902 = vmatpush1.msra.mxu0 0.0
    %903 = vmatprep.subr.mxu0 0.0
    %904 = vmatpush1.msra.mxu0 0.0
    %905 = vmatprep.subr.mxu0 0.0
    %906 = vmatpush1.msra.mxu0 0.0
    %907 = vmatprep.subr.mxu0 0.0
    %908 = vmatpush1.msra.mxu0 0.0
    %909 = vmatprep.subr.mxu0 0.0
    %910 = vmatpush1.msra.mxu0 0.0
    %911 = vmatprep.subr.mxu0 0.0
    %912 = vmatpush1.msra.mxu0 0.0
    %913 = vmatprep.subr.mxu0 0.0
    %914 = vmatpush1.msra.mxu0 0.0
    %915 = vmatprep.subr.mxu0 0.0
    %916 = vmatpush1.msra.mxu0 0.0
    %917 = vmatprep.subr.mxu0 0.0
    %918 = vmatpush1.msra.mxu0 0.0
    %919 = vmatprep.subr.mxu0 0.0
    %920 = vmatpush1.msra.mxu0 0.0
    %921 = vmatprep.subr.mxu0 0.0
    %922 = vmatpush1.msra.mxu0 0.0
    %923 = vmatprep.subr.mxu0 0.0
    %924 = vmatpush1.msra.mxu0 0.0
    %925 = vmatprep.subr.mxu0 0.0
    %926 = vmatpush1.msra.mxu0 0.0
    %927 = vmatprep.subr.mxu0 0.0
    %928 = vmatpush1.msra.mxu0 0.0
    %929 = vmatprep.subr.mxu0 0.0
    %930 = vmatpush1.msra.mxu0 0.0
    %931 = vmatprep.subr.mxu0 0.0
    %932 = vmatpush1.msra.mxu0 0.0
    %933 = vmatprep.subr.mxu0 0.0
    %934 = vmatpush1.msra.mxu0 0.0
    %935 = vmatprep.subr.mxu0 0.0
    %936 = vmatpush1.msra.mxu0 0.0
    %937 = vmatprep.subr.mxu0 0.0
    %938 = vmatpush1.msra.mxu0 0.0
    %939 = vmatprep.subr.mxu0 0.0
    %940 = vmatpush1.msra.mxu0 0.0
    %941 = vmatprep.subr.mxu0 0.0
    %942 = vmatpush1.msra.mxu0 0.0
    %943 = vmatprep.subr.mxu0 0.0
    %944 = vmatpush1.msra.mxu0 0.0
    %945 = vmatprep.subr.mxu0 0.0
    %946 = vmatpush1.msra.mxu0 0.0
    %947 = vmatprep.subr.mxu0 0.0
    %948 = vmatpush1.msra.mxu0 0.0
    %949 = vmatprep.subr.mxu0 0.0
    %950 = vmatpush1.msra.mxu0 0.0
    %951 = vmatprep.subr.mxu0 0.0
    %952 = vmatpush1.msra.mxu0 0.0
    %953 = vmatprep.mubr.f32.mxu0 0.0
    %954 = vmatmul.mubr.f32.gmra.mrb[0].mxu0 %v884
    %v955 = vpop.f32.mrb[0].mxu0
    %v956 = vadd.f32 0.0, %v955
    %v957 = vpop.f32.mrb[0].mxu0
    %958 = vmatprep.mubr.f32.mxu0 0.0
    %959 = vmatmul.mubr.f32.gmra.mrb[0].mxu0 %v887
    %v960 = vpop.f32.mrb[0].mxu0
    %v961 = vadd.f32 0.0, %v960
    %v962 = vpop.f32.mrb[0].mxu0
    %963 = vdwg.mxu0
    %v965 = vlaneseq
    %v966 = vshrl.u32 %v965, 7
    %v967 = vsub.s32 0, %v966
    %v968 = vrot.slane %v880, %v967
    %v970 = vmul.f32 %v956, %v968
    %v971 = vmul.f32 %v961, %v968
    %v972 = vsel %vm183, %v970, 0.0
    %973 = vadd.xlane.f32.xlu0 %v972
    %v974 = vpop.xlane.xlu0 %973
    %v975 = vsel %vm183, %v971, 0.0
    %976 = vadd.xlane.f32.xlu0 %v975
    %v977 = vpop.xlane.xlu0 %976
    %v979 = vlaneseq
    %v980 = vshrl.u32 %v979, 7
    %v981 = vsub.s32 0, %v980
    %v982 = vrot.slane %v881, %v981
    %v984 = vmul.f32 %v956, %v982
    %v985 = vmul.f32 %v961, %v982
    %v986 = vsel %vm183, %v984, 0.0
    %987 = vadd.xlane.f32.xlu0 %v986
    %v988 = vpop.xlane.xlu0 %987
    %v989 = vsel %vm183, %v985, 0.0
    %990 = vadd.xlane.f32.xlu0 %v989
    %v991 = vpop.xlane.xlu0 %990
    %994 = vrot.lane.b32.xlu0 %v970, 120
    %v995 = vpop.permute.xlu0 %994
    %996 = vrot.lane.b32.xlu0 %v971, 120
    %v997 = vpop.permute.xlu0 %996
    %v1000 = vsel %vm183, %v995, 0.0
    %1001 = vadd.xlane.f32.xlu0 %v1000
    %v1002 = vpop.xlane.xlu0 %1001
    %v1003 = vsel %vm183, %v997, 0.0
    %1004 = vadd.xlane.f32.xlu0 %v1003
    %v1005 = vpop.xlane.xlu0 %1004
    %1008 = vrot.lane.b32.xlu0 %v984, 120
    %v1009 = vpop.permute.xlu0 %1008
    %1010 = vrot.lane.b32.xlu0 %v985, 120
    %v1011 = vpop.permute.xlu0 %1010
    %v1014 = vsel %vm183, %v1009, 0.0
    %1015 = vadd.xlane.f32.xlu0 %v1014
    %v1016 = vpop.xlane.xlu0 %1015
    %v1017 = vsel %vm183, %v1011, 0.0
    %1018 = vadd.xlane.f32.xlu0 %v1017
    %v1019 = vpop.xlane.xlu0 %1018
    %1020 = vrot.lane.b32.xlu0 %v970, 112
    %v1021 = vpop.permute.xlu0 %1020
    %1022 = vrot.lane.b32.xlu0 %v971, 112
    %v1023 = vpop.permute.xlu0 %1022
    %v1026 = vsel %vm183, %v1021, 0.0
    %1027 = vadd.xlane.f32.xlu0 %v1026
    %v1028 = vpop.xlane.xlu0 %1027
    %v1029 = vsel %vm183, %v1023, 0.0
    %1030 = vadd.xlane.f32.xlu0 %v1029
    %v1031 = vpop.xlane.xlu0 %1030
    %1032 = vrot.lane.b32.xlu0 %v984, 112
    %v1033 = vpop.permute.xlu0 %1032
    %1034 = vrot.lane.b32.xlu0 %v985, 112
    %v1035 = vpop.permute.xlu0 %1034
    %v1038 = vsel %vm183, %v1033, 0.0
    %1039 = vadd.xlane.f32.xlu0 %v1038
    %v1040 = vpop.xlane.xlu0 %1039
    %v1041 = vsel %vm183, %v1035, 0.0
    %1042 = vadd.xlane.f32.xlu0 %v1041
    %v1043 = vpop.xlane.xlu0 %1042
    %1044 = vrot.lane.b32.xlu0 %v970, 104
    %v1045 = vpop.permute.xlu0 %1044
    %1046 = vrot.lane.b32.xlu0 %v971, 104
    %v1047 = vpop.permute.xlu0 %1046
    %v1050 = vsel %vm183, %v1045, 0.0
    %1051 = vadd.xlane.f32.xlu0 %v1050
    %v1052 = vpop.xlane.xlu0 %1051
    %v1053 = vsel %vm183, %v1047, 0.0
    %1054 = vadd.xlane.f32.xlu0 %v1053
    %v1055 = vpop.xlane.xlu0 %1054
    %1056 = vrot.lane.b32.xlu0 %v984, 104
    %v1057 = vpop.permute.xlu0 %1056
    %1058 = vrot.lane.b32.xlu0 %v985, 104
    %v1059 = vpop.permute.xlu0 %1058
    %v1062 = vsel %vm183, %v1057, 0.0
    %1063 = vadd.xlane.f32.xlu0 %v1062
    %v1064 = vpop.xlane.xlu0 %1063
    %v1065 = vsel %vm183, %v1059, 0.0
    %1066 = vadd.xlane.f32.xlu0 %v1065
    %v1067 = vpop.xlane.xlu0 %1066
    %v1068 = vsel %vm280, %v974, %v1002
    %v1069 = vsel %vm280, %v977, %v1005
    %v1070 = vsel %vm283, %v1068, %v1028
    %v1071 = vsel %vm283, %v1069, %v1031
    %v1072 = vsel %vm286, %v1070, %v1052
    %v1073 = vsel %vm286, %v1071, %v1055
    %1074 = vxpose.xlu0.b32.start [1/16] %v1072, 128
    %1075 = vxpose.xlu0.b32.cont [2/16] %v1073, 128
    %1076 = vxpose.xlu0.b32.cont [3/16] 0.0, 128
    %1077 = vxpose.xlu0.b32.cont [4/16] 0.0, 128
    %1078 = vxpose.xlu0.b32.cont [5/16] 0.0, 128
    %1079 = vxpose.xlu0.b32.cont [6/16] 0.0, 128
    %1080 = vxpose.xlu0.b32.cont [7/16] 0.0, 128
    %1081 = vxpose.xlu0.b32.cont [8/16] 0.0, 128
    %1082 = vxpose.xlu0.b32.cont [9/16] 0.0, 128
    %1083 = vxpose.xlu0.b32.cont [10/16] 0.0, 128
    %1084 = vxpose.xlu0.b32.cont [11/16] 0.0, 128
    %1085 = vxpose.xlu0.b32.cont [12/16] 0.0, 128
    %1086 = vxpose.xlu0.b32.cont [13/16] 0.0, 128
    %1087 = vxpose.xlu0.b32.cont [14/16] 0.0, 128
    %1088 = vxpose.xlu0.b32.cont [15/16] 0.0, 128
    %1089 = vxpose.xlu0.b32.end [16/16] 0.0, 128
    %v1090 = vpop.trf.xlu0
    %v1091 = vpop.trf.xlu0
    %v1092 = vpop.trf.xlu0
    %v1093 = vpop.trf.xlu0
    %v1094 = vpop.trf.xlu0
    %v1095 = vpop.trf.xlu0
    %v1096 = vpop.trf.xlu0
    %v1097 = vpop.trf.xlu0
    %v1098 = vpop.trf.xlu0
    %v1099 = vpop.trf.xlu0
    %v1100 = vpop.trf.xlu0
    %v1101 = vpop.trf.xlu0
    %v1102 = vpop.trf.xlu0
    %v1103 = vpop.trf.xlu0
    %v1104 = vpop.trf.xlu0
    %v1105 = vpop.trf.xlu0
    %v1106 = vlaneseq
    %v1107 = vshrl.u32 %v1106, 7
    %v1108 = vsub.s32 0, %v1107
    %v1109 = vrot.slane %v1090, %v1108
    %v1110 = vadd.f32 %v988, %v1109
    %v1111 = vadd.f32 %v991, %v1109
    %v1112 = vlaneseq
    %v1113 = vshrl.u32 %v1112, 7
    %v1114 = vsub.s32 1, %v1113
    %v1115 = vrot.slane %v1090, %v1114
    %v1116 = vadd.f32 %v1016, %v1115
    %v1117 = vadd.f32 %v1019, %v1115
    %v1118 = vlaneseq
    %v1119 = vshrl.u32 %v1118, 7
    %v1120 = vsub.s32 2, %v1119
    %v1121 = vrot.slane %v1090, %v1120
    %v1122 = vadd.f32 %v1040, %v1121
    %v1123 = vadd.f32 %v1043, %v1121
    %v1124 = vlaneseq
    %v1125 = vshrl.u32 %v1124, 7
    %v1126 = vsub.s32 3, %v1125
    %v1127 = vrot.slane %v1090, %v1126
    %v1128 = vadd.f32 %v1064, %v1127
    %v1129 = vadd.f32 %v1067, %v1127
    %vm1130 = vcmp.gt.f32.partialorder %v1110, 0.0
    %vm1131 = vcmp.gt.f32.partialorder %v1111, 0.0
    %vm1132 = vcmp.gt.f32.partialorder %v1116, 0.0
    %vm1133 = vcmp.gt.f32.partialorder %v1117, 0.0
    %vm1134 = vcmp.gt.f32.partialorder %v1122, 0.0
    %vm1135 = vcmp.gt.f32.partialorder %v1123, 0.0
    %vm1136 = vcmp.gt.f32.partialorder %v1128, 0.0
    %vm1137 = vcmp.gt.f32.partialorder %v1129, 0.0
    %v1138 = vmul.f32 %v1110, 0.2
    %v1139 = vmul.f32 %v1111, 0.2
    %v1140 = vmul.f32 %v1116, 0.2
    %v1141 = vmul.f32 %v1117, 0.2
    %v1142 = vmul.f32 %v1122, 0.2
    %v1143 = vmul.f32 %v1123, 0.2
    %v1144 = vmul.f32 %v1128, 0.2
    %v1145 = vmul.f32 %v1129, 0.2
    %v1146 = vsel %vm1130, %v1110, %v1138
    %v1147 = vsel %vm1131, %v1111, %v1139
    %v1148 = vsel %vm1132, %v1116, %v1140
    %v1149 = vsel %vm1133, %v1117, %v1141
    %v1150 = vsel %vm1134, %v1122, %v1142
    %v1151 = vsel %vm1135, %v1123, %v1143
    %v1152 = vsel %vm1136, %v1128, %v1144
    %v1153 = vsel %vm1137, %v1129, %v1145
    %v1154 = vsel %vm373, %v1146, -1e+30
    %v1155 = vsel %vm374, %v1147, -1e+30
    %v1156 = vsel %vm373, %v1148, -1e+30
    %v1157 = vsel %vm374, %v1149, -1e+30
    %v1158 = vsel %vm373, %v1150, -1e+30
    %v1159 = vsel %vm374, %v1151, -1e+30
    %v1160 = vsel %vm373, %v1152, -1e+30
    %v1161 = vsel %vm374, %v1153, -1e+30
    %v1162 = vsel %vm93, %v1154, -inf
    %1163 = vmax.xlane.f32.xlu0 %v1162
    %v1164 = vpop.xlane.xlu0 %1163
    %v1165 = vsel %vm93, %v1155, -inf
    %1166 = vmax.xlane.f32.xlu0 %v1165
    %v1167 = vpop.xlane.xlu0 %1166
    %v1168 = vsel %vm93, %v1156, -inf
    %1169 = vmax.xlane.f32.xlu0 %v1168
    %v1170 = vpop.xlane.xlu0 %1169
    %v1171 = vsel %vm93, %v1157, -inf
    %1172 = vmax.xlane.f32.xlu0 %v1171
    %v1173 = vpop.xlane.xlu0 %1172
    %v1174 = vsel %vm93, %v1158, -inf
    %1175 = vmax.xlane.f32.xlu0 %v1174
    %v1176 = vpop.xlane.xlu0 %1175
    %v1177 = vsel %vm93, %v1159, -inf
    %1178 = vmax.xlane.f32.xlu0 %v1177
    %v1179 = vpop.xlane.xlu0 %1178
    %v1180 = vsel %vm93, %v1160, -inf
    %1181 = vmax.xlane.f32.xlu0 %v1180
    %v1182 = vpop.xlane.xlu0 %1181
    %v1183 = vsel %vm93, %v1161, -inf
    %1184 = vmax.xlane.f32.xlu0 %v1183
    %v1185 = vpop.xlane.xlu0 %1184
    %v1186 = vsub.f32 %v1154, %v1164
    %v1187 = vsub.f32 %v1155, %v1167
    %v1188 = vsub.f32 %v1156, %v1170
    %v1189 = vsub.f32 %v1157, %v1173
    %v1190 = vsub.f32 %v1158, %v1176
    %v1191 = vsub.f32 %v1159, %v1179
    %v1192 = vsub.f32 %v1160, %v1182
    %v1193 = vsub.f32 %v1161, %v1185
    %v1194 = vmul.f32 %v1186, 1.442695
    %v1195 = vpow.pop %v1194
    %v1196 = vmul.f32 %v1187, 1.442695
    %v1197 = vpow.pop %v1196
    %v1198 = vmul.f32 %v1188, 1.442695
    %v1199 = vpow.pop %v1198
    %v1200 = vmul.f32 %v1189, 1.442695
    %v1201 = vpow.pop %v1200
    %v1202 = vmul.f32 %v1190, 1.442695
    %v1203 = vpow.pop %v1202
    %v1204 = vmul.f32 %v1191, 1.442695
    %v1205 = vpow.pop %v1204
    %v1206 = vmul.f32 %v1192, 1.442695
    %v1207 = vpow.pop %v1206
    %v1208 = vmul.f32 %v1193, 1.442695
    %v1209 = vpow.pop %v1208
    %v1210 = vsel %vm93, %v1195, 0.0
    %1211 = vadd.xlane.f32.xlu0 %v1210
    %v1212 = vpop.xlane.xlu0 %1211
    %v1213 = vsel %vm93, %v1197, 0.0
    %1214 = vadd.xlane.f32.xlu0 %v1213
    %v1215 = vpop.xlane.xlu0 %1214
    %v1216 = vsel %vm93, %v1199, 0.0
    %1217 = vadd.xlane.f32.xlu0 %v1216
    %v1218 = vpop.xlane.xlu0 %1217
    %v1219 = vsel %vm93, %v1201, 0.0
    %1220 = vadd.xlane.f32.xlu0 %v1219
    %v1221 = vpop.xlane.xlu0 %1220
    %v1222 = vsel %vm93, %v1203, 0.0
    %1223 = vadd.xlane.f32.xlu0 %v1222
    %v1224 = vpop.xlane.xlu0 %1223
    %v1225 = vsel %vm93, %v1205, 0.0
    %1226 = vadd.xlane.f32.xlu0 %v1225
    %v1227 = vpop.xlane.xlu0 %1226
    %v1228 = vsel %vm93, %v1207, 0.0
    %1229 = vadd.xlane.f32.xlu0 %v1228
    %v1230 = vpop.xlane.xlu0 %1229
    %v1231 = vsel %vm93, %v1209, 0.0
    %1232 = vadd.xlane.f32.xlu0 %v1231
    %v1233 = vpop.xlane.xlu0 %1232
    %v1234 = vrcp.pop %v1212
    %v1235 = vrcp.pop %v1215
    %v1236 = vrcp.pop %v1218
    %v1237 = vrcp.pop %v1221
    %v1238 = vrcp.pop %v1224
    %v1239 = vrcp.pop %v1227
    %v1240 = vrcp.pop %v1230
    %v1241 = vrcp.pop %v1233
    %v1242 = vmul.f32 %v1195, %v1234
    %v1243 = vmul.f32 %v1197, %v1235
    %v1244 = vmul.f32 %v1199, %v1236
    %v1245 = vmul.f32 %v1201, %v1237
    %v1246 = vmul.f32 %v1203, %v1238
    %v1247 = vmul.f32 %v1205, %v1239
    %v1248 = vmul.f32 %v1207, %v1240
    %v1249 = vmul.f32 %v1209, %v1241
    %v1251 = vsel %vm93, %v1242, 0
    %v1254 = vsel %vm93, %v1243, 0
    %1256 = vmatprep.subr.mxu0 0.0
    %1257 = vmatpush1.msra.mxu0 %v956
    %1258 = vmatprep.subr.mxu0 0.0
    %1259 = vmatpush1.msra.mxu0 %v961
    %1260 = vmatprep.subr.mxu0 0.0
    %1261 = vmatpush1.msra.mxu0 0.0
    %1262 = vmatprep.subr.mxu0 0.0
    %1263 = vmatpush1.msra.mxu0 0.0
    %1264 = vmatprep.subr.mxu0 0.0
    %1265 = vmatpush1.msra.mxu0 0.0
    %1266 = vmatprep.subr.mxu0 0.0
    %1267 = vmatpush1.msra.mxu0 0.0
    %1268 = vmatprep.subr.mxu0 0.0
    %1269 = vmatpush1.msra.mxu0 0.0
    %1270 = vmatprep.subr.mxu0 0.0
    %1271 = vmatpush1.msra.mxu0 0.0
    %1272 = vmatprep.subr.mxu0 0.0
    %1273 = vmatpush1.msra.mxu0 0.0
    %1274 = vmatprep.subr.mxu0 0.0
    %1275 = vmatpush1.msra.mxu0 0.0
    %1276 = vmatprep.subr.mxu0 0.0
    %1277 = vmatpush1.msra.mxu0 0.0
    %1278 = vmatprep.subr.mxu0 0.0
    %1279 = vmatpush1.msra.mxu0 0.0
    %1280 = vmatprep.subr.mxu0 0.0
    %1281 = vmatpush1.msra.mxu0 0.0
    %1282 = vmatprep.subr.mxu0 0.0
    %1283 = vmatpush1.msra.mxu0 0.0
    %1284 = vmatprep.subr.mxu0 0.0
    %1285 = vmatpush1.msra.mxu0 0.0
    %1286 = vmatprep.subr.mxu0 0.0
    %1287 = vmatpush1.msra.mxu0 0.0
    %1288 = vmatprep.subr.mxu0 0.0
    %1289 = vmatpush1.msra.mxu0 0.0
    %1290 = vmatprep.subr.mxu0 0.0
    %1291 = vmatpush1.msra.mxu0 0.0
    %1292 = vmatprep.subr.mxu0 0.0
    %1293 = vmatpush1.msra.mxu0 0.0
    %1294 = vmatprep.subr.mxu0 0.0
    %1295 = vmatpush1.msra.mxu0 0.0
    %1296 = vmatprep.subr.mxu0 0.0
    %1297 = vmatpush1.msra.mxu0 0.0
    %1298 = vmatprep.subr.mxu0 0.0
    %1299 = vmatpush1.msra.mxu0 0.0
    %1300 = vmatprep.subr.mxu0 0.0
    %1301 = vmatpush1.msra.mxu0 0.0
    %1302 = vmatprep.subr.mxu0 0.0
    %1303 = vmatpush1.msra.mxu0 0.0
    %1304 = vmatprep.subr.mxu0 0.0
    %1305 = vmatpush1.msra.mxu0 0.0
    %1306 = vmatprep.subr.mxu0 0.0
    %1307 = vmatpush1.msra.mxu0 0.0
    %1308 = vmatprep.subr.mxu0 0.0
    %1309 = vmatpush1.msra.mxu0 0.0
    %1310 = vmatprep.subr.mxu0 0.0
    %1311 = vmatpush1.msra.mxu0 0.0
    %1312 = vmatprep.subr.mxu0 0.0
    %1313 = vmatpush1.msra.mxu0 0.0
    %1314 = vmatprep.subr.mxu0 0.0
    %1315 = vmatpush1.msra.mxu0 0.0
    %1316 = vmatprep.subr.mxu0 0.0
    %1317 = vmatpush1.msra.mxu0 0.0
    %1318 = vmatprep.subr.mxu0 0.0
    %1319 = vmatpush1.msra.mxu0 0.0
    %1320 = vmatprep.mubr.f32.mxu0 0.0
    %1321 = vmatmul.mubr.f32.gmra.mrb[0].mxu0 %v1251
    %v1322 = vpop.f32.mrb[0].mxu0
    %v1323 = vadd.f32 0.0, %v1322
    %v1324 = vpop.f32.mrb[0].mxu0
    %1325 = vmatprep.mubr.f32.mxu0 0.0
    %1326 = vmatmul.mubr.f32.gmra.mrb[0].mxu0 %v1254
    %v1327 = vpop.f32.mrb[0].mxu0
    %v1328 = vadd.f32 0.0, %v1327
    %v1329 = vpop.f32.mrb[0].mxu0
    %1330 = vdwg.mxu0
    %1331 = vst.msk [vmem:[#allocation11] sm:$0xff] %vm183, %v1323
    %1332 = vst.msk [vmem:[#allocation11 + $0x8] sm:$0xff] %vm183, %v1328
    %1335 = vrot.lane.b32.xlu0 %v956, 120
    %v1336 = vpop.permute.xlu0 %1335
    %1337 = vrot.lane.b32.xlu0 %v961, 120
    %v1338 = vpop.permute.xlu0 %1337
    %v1342 = vsel %vm93, %v1244, 0
    %v1345 = vsel %vm93, %v1245, 0
    %1347 = vmatprep.subr.mxu0 0.0
    %1348 = vmatpush1.msra.mxu0 %v1336
    %1349 = vmatprep.subr.mxu0 0.0
    %1350 = vmatpush1.msra.mxu0 %v1338
    %1351 = vmatprep.subr.mxu0 0.0
    %1352 = vmatpush1.msra.mxu0 0.0
    %1353 = vmatprep.subr.mxu0 0.0
    %1354 = vmatpush1.msra.mxu0 0.0
    %1355 = vmatprep.subr.mxu0 0.0
    %1356 = vmatpush1.msra.mxu0 0.0
    %1357 = vmatprep.subr.mxu0 0.0
    %1358 = vmatpush1.msra.mxu0 0.0
    %1359 = vmatprep.subr.mxu0 0.0
    %1360 = vmatpush1.msra.mxu0 0.0
    %1361 = vmatprep.subr.mxu0 0.0
    %1362 = vmatpush1.msra.mxu0 0.0
    %1363 = vmatprep.subr.mxu0 0.0
    %1364 = vmatpush1.msra.mxu0 0.0
    %1365 = vmatprep.subr.mxu0 0.0
    %1366 = vmatpush1.msra.mxu0 0.0
    %1367 = vmatprep.subr.mxu0 0.0
    %1368 = vmatpush1.msra.mxu0 0.0
    %1369 = vmatprep.subr.mxu0 0.0
    %1370 = vmatpush1.msra.mxu0 0.0
    %1371 = vmatprep.subr.mxu0 0.0
    %1372 = vmatpush1.msra.mxu0 0.0
    %1373 = vmatprep.subr.mxu0 0.0
    %1374 = vmatpush1.msra.mxu0 0.0
    %1375 = vmatprep.subr.mxu0 0.0
    %1376 = vmatpush1.msra.mxu0 0.0
    %1377 = vmatprep.subr.mxu0 0.0
    %1378 = vmatpush1.msra.mxu0 0.0
    %1379 = vmatprep.subr.mxu0 0.0
    %1380 = vmatpush1.msra.mxu0 0.0
    %1381 = vmatprep.subr.mxu0 0.0
    %1382 = vmatpush1.msra.mxu0 0.0
    %1383 = vmatprep.subr.mxu0 0.0
    %1384 = vmatpush1.msra.mxu0 0.0
    %1385 = vmatprep.subr.mxu0 0.0
    %1386 = vmatpush1.msra.mxu0 0.0
    %1387 = vmatprep.subr.mxu0 0.0
    %1388 = vmatpush1.msra.mxu0 0.0
    %1389 = vmatprep.subr.mxu0 0.0
    %1390 = vmatpush1.msra.mxu0 0.0
    %1391 = vmatprep.subr.mxu0 0.0
    %1392 = vmatpush1.msra.mxu0 0.0
    %1393 = vmatprep.subr.mxu0 0.0
    %1394 = vmatpush1.msra.mxu0 0.0
    %1395 = vmatprep.subr.mxu0 0.0
    %1396 = vmatpush1.msra.mxu0 0.0
    %1397 = vmatprep.subr.mxu0 0.0
    %1398 = vmatpush1.msra.mxu0 0.0
    %1399 = vmatprep.subr.mxu0 0.0
    %1400 = vmatpush1.msra.mxu0 0.0
    %1401 = vmatprep.subr.mxu0 0.0
    %1402 = vmatpush1.msra.mxu0 0.0
    %1403 = vmatprep.subr.mxu0 0.0
    %1404 = vmatpush1.msra.mxu0 0.0
    %1405 = vmatprep.subr.mxu0 0.0
    %1406 = vmatpush1.msra.mxu0 0.0
    %1407 = vmatprep.subr.mxu0 0.0
    %1408 = vmatpush1.msra.mxu0 0.0
    %1409 = vmatprep.subr.mxu0 0.0
    %1410 = vmatpush1.msra.mxu0 0.0
    %1411 = vmatprep.mubr.f32.mxu0 0.0
    %1412 = vmatmul.mubr.f32.gmra.mrb[0].mxu0 %v1342
    %v1413 = vpop.f32.mrb[0].mxu0
    %v1414 = vadd.f32 0.0, %v1413
    %v1415 = vpop.f32.mrb[0].mxu0
    %1416 = vmatprep.mubr.f32.mxu0 0.0
    %1417 = vmatmul.mubr.f32.gmra.mrb[0].mxu0 %v1345
    %v1418 = vpop.f32.mrb[0].mxu0
    %v1419 = vadd.f32 0.0, %v1418
    %v1420 = vpop.f32.mrb[0].mxu0
    %1421 = vdwg.mxu0
    %1424 = vrot.lane.b32.xlu0 %v1414, 8
    %v1425 = vpop.permute.xlu0 %1424
    %1426 = vrot.lane.b32.xlu0 %v1419, 8
    %v1427 = vpop.permute.xlu0 %1426
    %1430 = vst.msk [vmem:[#allocation11] sm:$0xff] %vm663, %v1425
    %1431 = vst.msk [vmem:[#allocation11 + $0x8] sm:$0xff] %vm663, %v1427
    %1432 = vrot.lane.b32.xlu0 %v956, 112
    %v1433 = vpop.permute.xlu0 %1432
    %1434 = vrot.lane.b32.xlu0 %v961, 112
    %v1435 = vpop.permute.xlu0 %1434
    %v1439 = vsel %vm93, %v1246, 0
    %v1442 = vsel %vm93, %v1247, 0
    %1444 = vmatprep.subr.mxu0 0.0
    %1445 = vmatpush1.msra.mxu0 %v1433
    %1446 = vmatprep.subr.mxu0 0.0
    %1447 = vmatpush1.msra.mxu0 %v1435
    %1448 = vmatprep.subr.mxu0 0.0
    %1449 = vmatpush1.msra.mxu0 0.0
    %1450 = vmatprep.subr.mxu0 0.0
    %1451 = vmatpush1.msra.mxu0 0.0
    %1452 = vmatprep.subr.mxu0 0.0
    %1453 = vmatpush1.msra.mxu0 0.0
    %1454 = vmatprep.subr.mxu0 0.0
    %1455 = vmatpush1.msra.mxu0 0.0
    %1456 = vmatprep.subr.mxu0 0.0
    %1457 = vmatpush1.msra.mxu0 0.0
    %1458 = vmatprep.subr.mxu0 0.0
    %1459 = vmatpush1.msra.mxu0 0.0
    %1460 = vmatprep.subr.mxu0 0.0
    %1461 = vmatpush1.msra.mxu0 0.0
    %1462 = vmatprep.subr.mxu0 0.0
    %1463 = vmatpush1.msra.mxu0 0.0
    %1464 = vmatprep.subr.mxu0 0.0
    %1465 = vmatpush1.msra.mxu0 0.0
    %1466 = vmatprep.subr.mxu0 0.0
    %1467 = vmatpush1.msra.mxu0 0.0
    %1468 = vmatprep.subr.mxu0 0.0
    %1469 = vmatpush1.msra.mxu0 0.0
    %1470 = vmatprep.subr.mxu0 0.0
    %1471 = vmatpush1.msra.mxu0 0.0
    %1472 = vmatprep.subr.mxu0 0.0
    %1473 = vmatpush1.msra.mxu0 0.0
    %1474 = vmatprep.subr.mxu0 0.0
    %1475 = vmatpush1.msra.mxu0 0.0
    %1476 = vmatprep.subr.mxu0 0.0
    %1477 = vmatpush1.msra.mxu0 0.0
    %1478 = vmatprep.subr.mxu0 0.0
    %1479 = vmatpush1.msra.mxu0 0.0
    %1480 = vmatprep.subr.mxu0 0.0
    %1481 = vmatpush1.msra.mxu0 0.0
    %1482 = vmatprep.subr.mxu0 0.0
    %1483 = vmatpush1.msra.mxu0 0.0
    %1484 = vmatprep.subr.mxu0 0.0
    %1485 = vmatpush1.msra.mxu0 0.0
    %1486 = vmatprep.subr.mxu0 0.0
    %1487 = vmatpush1.msra.mxu0 0.0
    %1488 = vmatprep.subr.mxu0 0.0
    %1489 = vmatpush1.msra.mxu0 0.0
    %1490 = vmatprep.subr.mxu0 0.0
    %1491 = vmatpush1.msra.mxu0 0.0
    %1492 = vmatprep.subr.mxu0 0.0
    %1493 = vmatpush1.msra.mxu0 0.0
    %1494 = vmatprep.subr.mxu0 0.0
    %1495 = vmatpush1.msra.mxu0 0.0
    %1496 = vmatprep.subr.mxu0 0.0
    %1497 = vmatpush1.msra.mxu0 0.0
    %1498 = vmatprep.subr.mxu0 0.0
    %1499 = vmatpush1.msra.mxu0 0.0
    %1500 = vmatprep.subr.mxu0 0.0
    %1501 = vmatpush1.msra.mxu0 0.0
    %1502 = vmatprep.subr.mxu0 0.0
    %1503 = vmatpush1.msra.mxu0 0.0
    %1504 = vmatprep.subr.mxu0 0.0
    %1505 = vmatpush1.msra.mxu0 0.0
    %1506 = vmatprep.subr.mxu0 0.0
    %1507 = vmatpush1.msra.mxu0 0.0
    %1508 = vmatprep.mubr.f32.mxu0 0.0
    %1509 = vmatmul.mubr.f32.gmra.mrb[0].mxu0 %v1439
    %v1510 = vpop.f32.mrb[0].mxu0
    %v1511 = vadd.f32 0.0, %v1510
    %v1512 = vpop.f32.mrb[0].mxu0
    %1513 = vmatprep.mubr.f32.mxu0 0.0
    %1514 = vmatmul.mubr.f32.gmra.mrb[0].mxu0 %v1442
    %v1515 = vpop.f32.mrb[0].mxu0
    %v1516 = vadd.f32 0.0, %v1515
    %v1517 = vpop.f32.mrb[0].mxu0
    %1518 = vdwg.mxu0
    %1521 = vrot.lane.b32.xlu0 %v1511, 16
    %v1522 = vpop.permute.xlu0 %1521
    %1523 = vrot.lane.b32.xlu0 %v1516, 16
    %v1524 = vpop.permute.xlu0 %1523
    %1527 = vst.msk [vmem:[#allocation11] sm:$0xff] %vm767, %v1522
    %1528 = vst.msk [vmem:[#allocation11 + $0x8] sm:$0xff] %vm767, %v1524
    %1529 = vrot.lane.b32.xlu0 %v956, 104
    %v1530 = vpop.permute.xlu0 %1529
    %1531 = vrot.lane.b32.xlu0 %v961, 104
    %v1532 = vpop.permute.xlu0 %1531
    %v1536 = vsel %vm93, %v1248, 0
    %v1539 = vsel %vm93, %v1249, 0
    %1541 = vmatprep.subr.mxu0 0.0
    %1542 = vmatpush1.msra.mxu0 %v1530
    %1543 = vmatprep.subr.mxu0 0.0
    %1544 = vmatpush1.msra.mxu0 %v1532
    %1545 = vmatprep.subr.mxu0 0.0
    %1546 = vmatpush1.msra.mxu0 0.0
    %1547 = vmatprep.subr.mxu0 0.0
    %1548 = vmatpush1.msra.mxu0 0.0
    %1549 = vmatprep.subr.mxu0 0.0
    %1550 = vmatpush1.msra.mxu0 0.0
    %1551 = vmatprep.subr.mxu0 0.0
    %1552 = vmatpush1.msra.mxu0 0.0
    %1553 = vmatprep.subr.mxu0 0.0
    %1554 = vmatpush1.msra.mxu0 0.0
    %1555 = vmatprep.subr.mxu0 0.0
    %1556 = vmatpush1.msra.mxu0 0.0
    %1557 = vmatprep.subr.mxu0 0.0
    %1558 = vmatpush1.msra.mxu0 0.0
    %1559 = vmatprep.subr.mxu0 0.0
    %1560 = vmatpush1.msra.mxu0 0.0
    %1561 = vmatprep.subr.mxu0 0.0
    %1562 = vmatpush1.msra.mxu0 0.0
    %1563 = vmatprep.subr.mxu0 0.0
    %1564 = vmatpush1.msra.mxu0 0.0
    %1565 = vmatprep.subr.mxu0 0.0
    %1566 = vmatpush1.msra.mxu0 0.0
    %1567 = vmatprep.subr.mxu0 0.0
    %1568 = vmatpush1.msra.mxu0 0.0
    %1569 = vmatprep.subr.mxu0 0.0
    %1570 = vmatpush1.msra.mxu0 0.0
    %1571 = vmatprep.subr.mxu0 0.0
    %1572 = vmatpush1.msra.mxu0 0.0
    %1573 = vmatprep.subr.mxu0 0.0
    %1574 = vmatpush1.msra.mxu0 0.0
    %1575 = vmatprep.subr.mxu0 0.0
    %1576 = vmatpush1.msra.mxu0 0.0
    %1577 = vmatprep.subr.mxu0 0.0
    %1578 = vmatpush1.msra.mxu0 0.0
    %1579 = vmatprep.subr.mxu0 0.0
    %1580 = vmatpush1.msra.mxu0 0.0
    %1581 = vmatprep.subr.mxu0 0.0
    %1582 = vmatpush1.msra.mxu0 0.0
    %1583 = vmatprep.subr.mxu0 0.0
    %1584 = vmatpush1.msra.mxu0 0.0
    %1585 = vmatprep.subr.mxu0 0.0
    %1586 = vmatpush1.msra.mxu0 0.0
    %1587 = vmatprep.subr.mxu0 0.0
    %1588 = vmatpush1.msra.mxu0 0.0
    %1589 = vmatprep.subr.mxu0 0.0
    %1590 = vmatpush1.msra.mxu0 0.0
    %1591 = vmatprep.subr.mxu0 0.0
    %1592 = vmatpush1.msra.mxu0 0.0
    %1593 = vmatprep.subr.mxu0 0.0
    %1594 = vmatpush1.msra.mxu0 0.0
    %1595 = vmatprep.subr.mxu0 0.0
    %1596 = vmatpush1.msra.mxu0 0.0
    %1597 = vmatprep.subr.mxu0 0.0
    %1598 = vmatpush1.msra.mxu0 0.0
    %1599 = vmatprep.subr.mxu0 0.0
    %1600 = vmatpush1.msra.mxu0 0.0
    %1601 = vmatprep.subr.mxu0 0.0
    %1602 = vmatpush1.msra.mxu0 0.0
    %1603 = vmatprep.subr.mxu0 0.0
    %1604 = vmatpush1.msra.mxu0 0.0
    %1605 = vmatprep.mubr.f32.mxu0 0.0
    %1606 = vmatmul.mubr.f32.gmra.mrb[0].mxu0 %v1536
    %v1607 = vpop.f32.mrb[0].mxu0
    %v1608 = vadd.f32 0.0, %v1607
    %v1609 = vpop.f32.mrb[0].mxu0
    %1610 = vmatprep.mubr.f32.mxu0 0.0
    %1611 = vmatmul.mubr.f32.gmra.mrb[0].mxu0 %v1539
    %v1612 = vpop.f32.mrb[0].mxu0
    %v1613 = vadd.f32 0.0, %v1612
    %v1614 = vpop.f32.mrb[0].mxu0
    %1615 = vdwg.mxu0
    %1618 = vrot.lane.b32.xlu0 %v1608, 24
    %v1619 = vpop.permute.xlu0 %1618
    %1620 = vrot.lane.b32.xlu0 %v1613, 24
    %v1621 = vpop.permute.xlu0 %1620
    %1624 = vst.msk [vmem:[#allocation11] sm:$0xff] %vm871, %v1619
    %1625 = vst.msk [vmem:[#allocation11 + $0x8] sm:$0xff] %vm871, %v1621
    // Predicated region
    $region50: #{tpu_custom_call.1} parent=1 // pred_check
      _
    $region51: #{tpu_custom_call.1} parent=1 // pred_check_branch
      %1627 = sbr.rel (0) target = $region53
    $region52: #{tpu_custom_call.1} parent=1 // pred_region
      %s1629 = ssub.s32 256, 256
      %1630 = vsyncadd [#allocation5], %s1629
      %s1631 = sshll.u32 [#allocation11], 4
      %s1632 = int_to_ptr.vmem [resolvable:$true] %s1631
      %1637 = dma.vmem_to_hbm [thread:$0]  %s1632, 256, %s8, [#allocation5], 128, 128, 8
    $region53: #{tpu_custom_call.1} parent=1 // pred_fallthru
      _
    // Predicated region
    $region54: #{tpu_custom_call.1} parent=1 // pred_check
      _
    $region55: #{tpu_custom_call.1} parent=1 // pred_check_branch
      %1639 = sbr.rel (0) target = $region57
    $region56: #{tpu_custom_call.1} parent=1 // pred_region
      %1640 = dma.done [#allocation5], 256
    $region57: #{tpu_custom_call.1} parent=1 // pred_fallthru
      _
    %1641 = vsyncpa [#allocation4], 1
    %1642 = vsyncpa [#allocation7], 1
    %1643 = vsyncpa [#allocation10], 1
    %1644 = vsyncpa [#allocation5], 1

</llo_original>
